<compile_context>
chip_gen: v6e
topology: v6e:2x2x1
jax: 0.10.0
libtpu: 0.0.40
codegen_flags: <defaults>
</compile_context>

<pallas_src>
import jax
import jax.numpy as jnp
from jax.experimental import pallas as pl
from jax.experimental.pallas import tpu as pltpu

HID = 32      # h_size
IN = 3        # in_size (3 features per electrode)
N_ELEC = 31   # electrodes 0..30
EPS = 1e-5
NSTEP = 4     # max sequence length across streams (Tp has 4 electrodes)
S1 = 8 * HID  # packed stage-1 width  (256)
S2 = 4 * HID  # packed stage-2 width  (128)
TB_MAX = 1024  # default batch tile (review: ~1024-2048 rows fits v7x 64 MiB)

# Electrode regions (same dict as the PyTorch module; only the used entries).
FR1 = (0, 2, 3)
FR2 = (30, 28, 29)
TP1 = (4, 8, 9, 13)          # used for BOTH tp_l and tp_r (module bug)
PR1 = (12,)
PR2 = (17,)
OC1 = (14,)
OC2 = (16,)


def region_rnn_kernel(x_ref, bn1_ref, wpre_ref, bpre_ref, whh1_ref,
                      wih2_ref, whh2_ref, b2_ref, whead_ref, bhead_ref,
                      out_ref):
    # ---- b_n1 applied as a precomputed per-column affine (batch stats are
    # computed in the wrapper over the FULL batch so tiling is bit-exact).
    x = x_ref[...]                                           # (TB, 93) f32
    xn = x * bn1_ref[0:1, :] + bn1_ref[1:2, :]

    # ---- stage-1 fused input projection: all 18 per-electrode projections
    # in one matmul against the block-placed weight (bias folded in).
    pre1 = jnp.dot(xn.astype(jnp.bfloat16), wpre_ref[...],
                   preferred_element_type=jnp.float32) + bpre_ref[...]  # (TB, 1024)

    whh1 = whh1_ref[...]          # (256, 256) bf16, block-diagonal
    wih2 = wih2_ref[...]          # (128, 128) bf16, block-diagonal
    whh2 = whh2_ref[...]          # (128, 128) bf16, block-diagonal

    B = x.shape[0]
    h1 = jnp.zeros((B, S1), jnp.bfloat16)
    h2 = jnp.zeros((B, S2), jnp.bfloat16)
    h2_steps = []
    for g in range(NSTEP):                                   # 4 static steps
        # packed stage-1 step (8 streams, block-diagonal W_hh)
        p1 = pre1[:, g * S1:(g + 1) * S1] + jnp.dot(
            h1, whh1, preferred_element_type=jnp.float32)
        h1 = jnp.tanh(p1.astype(jnp.bfloat16))               # bf16 EUP tanh
        # R - L difference (lane-aligned) feeds the packed stage-2 step
        diff = h1[:, S2:S1] - h1[:, 0:S2]                    # (TB, 128) bf16
        p2 = (jnp.dot(diff, wih2, preferred_element_type=jnp.float32)
              + b2_ref[g:g + 1, :]
              + jnp.dot(h2, whh2, preferred_element_type=jnp.float32))
        h2 = jnp.tanh(p2.astype(jnp.bfloat16))
        h2_steps.append(h2)

    # ---- flatten + 4 FC heads + concat = one (TB,512)@(512,64) matmul + ReLU
    h2_all = jnp.concatenate(h2_steps, axis=1)               # (TB, 512) bf16
    feats = jnp.dot(h2_all, whead_ref[...],
                    preferred_element_type=jnp.float32) + bhead_ref[...]
    out_ref[...] = jnp.maximum(feats, 0.0)                   # (TB, 64) f32


def init_params(key, hid=HID, in_size=IN):
    """PyTorch-equivalent parameters (fresh nn.Module init)."""
    keys = iter(jax.random.split(key, 24))

    def unif(k, shape, fan):
        bound = 1.0 / (fan ** 0.5)
        return jax.random.uniform(k, shape, jnp.float32, -bound, bound)

    p = {}
    # stage-1 RNNs (fL, fR, tL, tR, oL, oR); W_ih stored pre-transposed (D, H)
    p["w_ih1"] = unif(next(keys), (6, in_size, hid), hid)
    p["w_hh1"] = unif(next(keys), (6, hid, hid), hid)
    p["b_ih1"] = unif(next(keys), (6, 1, hid), hid)
    p["b_hh1"] = unif(next(keys), (6, 1, hid), hid)
    # stage-2 RNNs (f, p, o); input size == hidden size
    p["w_ih2"] = unif(next(keys), (3, hid, hid), hid)
    p["w_hh2"] = unif(next(keys), (3, hid, hid), hid)
    p["b_ih2"] = unif(next(keys), (3, 1, hid), hid)
    p["b_hh2"] = unif(next(keys), (3, 1, hid), hid)
    # FC heads (weights pre-transposed to (in, out))
    p["wf"] = unif(next(keys), (3 * hid, 16), 3 * hid)
    p["bf"] = unif(next(keys), (1, 16), 3 * hid)
    p["wt"] = unif(next(keys), (4 * hid, 16), 4 * hid)
    p["bt"] = unif(next(keys), (1, 16), 4 * hid)
    p["wp"] = unif(next(keys), (hid, 16), hid)
    p["bp"] = unif(next(keys), (1, 16), hid)
    p["wo"] = unif(next(keys), (hid, 16), hid)
    p["bo"] = unif(next(keys), (1, 16), hid)
    p["wfin"] = unif(next(keys), (64, 4), 64)
    p["bfin"] = unif(next(keys), (1, 4), 64)
    # BatchNorm affine params (PyTorch init: weight=1, bias=0)
    p["g1"] = jnp.ones((1, 1, in_size), jnp.float32)
    p["be1"] = jnp.zeros((1, 1, in_size), jnp.float32)
    p["g2"] = jnp.ones((1, 64), jnp.float32)
    p["be2"] = jnp.zeros((1, 64), jnp.float32)
    return p


def pack_params(p, hid=HID):
    """Build the fused / block-diagonal kernel parameters (done once)."""
    # stage-1 packed lane layout: [fL, tL, pL, oL | fR, tR, pR, oR]
    # each entry: (rnn1 index, electrode tuple, start step for right-alignment)
    slots1 = [
        (0, FR1, 1),   # fL
        (2, TP1, 0),   # tL
        (2, PR1, 3),   # pL  (module uses RNN_tL here)
        (4, OC1, 3),   # oL
        (1, FR2, 1),   # fR
        (3, TP1, 0),   # tR  (Tp1 indices reused, module bug)
        (3, PR2, 3),   # pR  (module uses RNN_tR here)
        (5, OC2, 3),   # oR
    ]
    wpre = jnp.zeros((N_ELEC * IN, NSTEP * S1), jnp.float32)
    bpre = jnp.zeros((1, NSTEP * S1), jnp.float32)
    whh1 = jnp.zeros((S1, S1), jnp.float32)
    for s, (ri, elec, start) in enumerate(slots1):
        whh1 = whh1.at[s * hid:(s + 1) * hid, s * hid:(s + 1) * hid].set(
            p["w_hh1"][ri])
        bias = p["b_ih1"][ri, 0] + p["b_hh1"][ri, 0]
        for t, e in enumerate(elec):
            g = start + t
            col0 = g * S1 + s * hid
            wpre = wpre.at[IN * e:IN * e + IN, col0:col0 + hid].set(
                p["w_ih1"][ri])
            bpre = bpre.at[0, col0:col0 + hid].set(bias)

    # stage-2 packed lane layout: [f, t, p, o]; (rnn2 index, start step)
    slots2 = [(0, 1),   # f  (RNN_f)
              (0, 0),   # t  (module uses RNN_f on the temporal diff)
              (1, 3),   # p  (RNN_p)
              (2, 3)]   # o  (RNN_o)
    wih2 = jnp.zeros((S2, S2), jnp.float32)
    whh2 = jnp.zeros((S2, S2), jnp.float32)
    b2 = jnp.zeros((NSTEP, S2), jnp.float32)
    for s, (ri, start) in enumerate(slots2):
        wih2 = wih2.at[s * hid:(s + 1) * hid, s * hid:(s + 1) * hid].set(
            p["w_ih2"][ri])
        whh2 = whh2.at[s * hid:(s + 1) * hid, s * hid:(s + 1) * hid].set(
            p["w_hh2"][ri])
        bias = p["b_ih2"][ri, 0] + p["b_hh2"][ri, 0]
        for g in range(start, NSTEP):
            b2 = b2.at[g, s * hid:(s + 1) * hid].set(bias)

    # fused FC heads: one (512, 64) matrix applied to the concatenated
    # stage-2 hiddens [h2(step0) | h2(step1) | h2(step2) | h2(step3)].
    whead = jnp.zeros((NSTEP, S2, 64), jnp.float32)
    for t in range(3):   # fc_f over steps g=1..3 -> columns 0:16
        whead = whead.at[t + 1, 0:hid, 0:16].set(p["wf"][t * hid:(t + 1) * hid])
    for t in range(4):   # fc_t over steps g=0..3 -> columns 16:32
        whead = whead.at[t, hid:2 * hid, 16:32].set(p["wt"][t * hid:(t + 1) * hid])
    whead = whead.at[3, 2 * hid:3 * hid, 32:48].set(p["wp"])   # fc_p
    whead = whead.at[3, 3 * hid:4 * hid, 48:64].set(p["wo"])   # fc_o
    whead = whead.reshape(NSTEP * S2, 64)
    bhead = jnp.concatenate([p["bf"], p["bt"], p["bp"], p["bo"]], axis=1)

    bf16 = jnp.bfloat16
    return {
        # in-kernel params
        "wpre": wpre.astype(bf16), "bpre": bpre,
        "whh1": whh1.astype(bf16),
        "wih2": wih2.astype(bf16), "whh2": whh2.astype(bf16), "b2": b2,
        "whead": whead.astype(bf16), "bhead": bhead,
        # wrapper-side params (BatchNorm affine, final linear)
        "g1": p["g1"].reshape(IN), "be1": p["be1"].reshape(IN),
        "g2": p["g2"], "be2": p["be2"],
        "wfin": p["wfin"], "bfin": p["bfin"],
    }


def region_rnn_forward(x, packed, tb=TB_MAX):
    B = x.shape[0]
    x93 = x.reshape(B, N_ELEC * IN).astype(jnp.float32)   # lane-dense input

    # ---- b_n1: training-mode batch statistics over the FULL batch, hoisted
    # out of the kernel (keeps batch tiling bit-exact) and folded into a
    # per-column affine (scale, shift).
    feat = x93.reshape(B * N_ELEC, IN)
    mu = jnp.mean(feat, axis=0)
    var = jnp.mean(jnp.square(feat - mu), axis=0)         # biased, as PyTorch
    scale3 = packed["g1"] * jax.lax.rsqrt(var + EPS)
    shift3 = packed["be1"] - mu * scale3
    bn1 = jnp.stack([jnp.tile(scale3, N_ELEC),
                     jnp.tile(shift3, N_ELEC)], axis=0)    # (2, 93)

    # ---- batch tiling (pad B up to a multiple of the tile if needed)
    if B <= tb:
        tb_eff, bp = B, B
        xp = x93
    else:
        tb_eff = max(8, (tb // 8) * 8)
        bp = -(-B // tb_eff) * tb_eff
        xp = jnp.pad(x93, ((0, bp - B), (0, 0)))

    const = lambda shape: pl.BlockSpec(shape, lambda i: (0, 0))  # VMEM-resident
    feats = pl.pallas_call(
        region_rnn_kernel,
        out_shape=jax.ShapeDtypeStruct((bp, 64), jnp.float32),
        grid=(bp // tb_eff,),
        in_specs=[
            pl.BlockSpec((tb_eff, N_ELEC * IN), lambda i: (i, 0)),  # x tile
            const((2, N_ELEC * IN)),            # bn1 scale/shift
            const((N_ELEC * IN, NSTEP * S1)),   # wpre
            const((1, NSTEP * S1)),             # bpre
            const((S1, S1)),                    # whh1
            const((S2, S2)),                    # wih2
            const((S2, S2)),                    # whh2
            const((NSTEP, S2)),                 # b2
            const((NSTEP * S2, 64)),            # whead
            const((1, 64)),                     # bhead
        ],
        out_specs=pl.BlockSpec((tb_eff, 64), lambda i: (i, 0)),
        compiler_params=pltpu.CompilerParams(
            dimension_semantics=("parallel",)),   # megacore on v7x
    )(xp, bn1, packed["wpre"], packed["bpre"], packed["whh1"],
      packed["wih2"], packed["whh2"], packed["b2"], packed["whead"],
      packed["bhead"])
    feats = feats[:B]                                        # drop padding

    # ---- b_n2 (training-mode batch stats) + fc_final + softmax in the
    # wrapper: (B, 64) is negligible HBM traffic and full-batch stats stay
    # exact regardless of the kernel's batch tiling.
    m2 = jnp.mean(feats, axis=0, keepdims=True)
    v2 = jnp.mean(jnp.square(feats - m2), axis=0, keepdims=True)
    fn = (feats - m2) * jax.lax.rsqrt(v2 + EPS) * packed["g2"] + packed["be2"]
    logits = fn @ packed["wfin"] + packed["bfin"]
    return jax.nn.softmax(logits, axis=1)


if __name__ == "__main__":
    key = jax.random.PRNGKey(0)
    kx, kx2, kp = jax.random.split(key, 3)
    params = init_params(kp)
    packed = pack_params(params)

    # x: (batch=2, electrodes=31, features=3); 31 electrodes are required by
    # the module's electrode dictionary, feature dim must be 3 == in_size.
    x = jax.random.normal(kx, (2, N_ELEC, IN), jnp.float32)
    out = jax.block_until_ready(region_rnn_forward(x, packed))
    assert out.shape == (2, 4)
    assert bool(jnp.all(jnp.isfinite(out)))
    assert bool(jnp.allclose(jnp.sum(out, axis=1), 1.0, atol=1e-5))

    # Also exercise the batch-grid + padding path (20 rows, tile=8 -> grid=3).
    x2 = jax.random.normal(kx2, (20, N_ELEC, IN), jnp.float32)
    out2 = jax.block_until_ready(region_rnn_forward(x2, packed, tb=8))
    assert out2.shape == (20, 4)
    assert bool(jnp.all(jnp.isfinite(out2)))
    assert bool(jnp.allclose(jnp.sum(out2, axis=1), 1.0, atol=1e-5))

    print("KERNEL_OK")
</pallas_src>

<mosaic_0001>
module attributes {stable_mosaic.version = 11 : i64} {
  func.func @region_rnn_kernel(%arg0: i32, %arg1: memref<2x93xf32, #tpu.memory_space<vmem>>, %arg2: memref<2x93xf32, #tpu.memory_space<vmem>>, %arg3: memref<93x1024xbf16, #tpu.memory_space<vmem>>, %arg4: memref<1x1024xf32, #tpu.memory_space<vmem>>, %arg5: memref<256x256xbf16, #tpu.memory_space<vmem>>, %arg6: memref<128x128xbf16, #tpu.memory_space<vmem>>, %arg7: memref<128x128xbf16, #tpu.memory_space<vmem>>, %arg8: memref<4x128xf32, #tpu.memory_space<vmem>>, %arg9: memref<512x64xbf16, #tpu.memory_space<vmem>>, %arg10: memref<1x64xf32, #tpu.memory_space<vmem>>, %arg11: memref<2x64xf32, #tpu.memory_space<vmem>>) attributes {dimension_semantics = [#tpu.dimension_semantics<parallel>], iteration_bounds = array<i64: 1>, scalar_prefetch = 0 : i64, scratch_operands = 0 : i64, tpu.core_type = #tpu.core_type<tc>, window_params = [{transform_indices = @transform_0, window_bounds = array<i64: 2, 93>}, {pipeline_mode = #tpu.pipeline_mode<synchronous>, transform_indices = @transform_1, window_bounds = array<i64: 2, 93>}, {pipeline_mode = #tpu.pipeline_mode<synchronous>, transform_indices = @transform_2, window_bounds = array<i64: 93, 1024>}, {pipeline_mode = #tpu.pipeline_mode<synchronous>, transform_indices = @transform_3, window_bounds = array<i64: 1, 1024>}, {pipeline_mode = #tpu.pipeline_mode<synchronous>, transform_indices = @transform_4, window_bounds = array<i64: 256, 256>}, {pipeline_mode = #tpu.pipeline_mode<synchronous>, transform_indices = @transform_5, window_bounds = array<i64: 128, 128>}, {pipeline_mode = #tpu.pipeline_mode<synchronous>, transform_indices = @transform_6, window_bounds = array<i64: 128, 128>}, {pipeline_mode = #tpu.pipeline_mode<synchronous>, transform_indices = @transform_7, window_bounds = array<i64: 4, 128>}, {pipeline_mode = #tpu.pipeline_mode<synchronous>, transform_indices = @transform_8, window_bounds = array<i64: 512, 64>}, {pipeline_mode = #tpu.pipeline_mode<synchronous>, transform_indices = @transform_9, window_bounds = array<i64: 1, 64>}, {transform_indices = @transform_10, window_bounds = array<i64: 2, 64>}]} {
    %c0 = arith.constant 0 : index
    %c0_0 = arith.constant 0 : index
    %0 = vector.load %arg1[%c0, %c0_0] : memref<2x93xf32, #tpu.memory_space<vmem>>, vector<2x93xf32>
    %c0_1 = arith.constant 0 : index
    %c0_2 = arith.constant 0 : index
    %1 = vector.load %arg2[%c0_1, %c0_2] : memref<2x93xf32, #tpu.memory_space<vmem>>, vector<1x93xf32>
    %2 = vector.broadcast %1 : vector<1x93xf32> to vector<2x93xf32>
    %3 = arith.mulf %0, %2 : vector<2x93xf32>
    %c1 = arith.constant 1 : index
    %c0_3 = arith.constant 0 : index
    %4 = vector.load %arg2[%c1, %c0_3] : memref<2x93xf32, #tpu.memory_space<vmem>>, vector<1x93xf32>
    %5 = vector.broadcast %4 : vector<1x93xf32> to vector<2x93xf32>
    %6 = arith.addf %3, %5 : vector<2x93xf32>
    %7 = arith.truncf %6 : vector<2x93xf32> to vector<2x93xbf16>
    %c0_4 = arith.constant 0 : index
    %c0_5 = arith.constant 0 : index
    %8 = vector.load %arg3[%c0_4, %c0_5] : memref<93x1024xbf16, #tpu.memory_space<vmem>>, vector<93x1024xbf16>
    %cst = arith.constant dense<0.000000e+00> : vector<2x1024xf32>
    %9 = tpu.matmul %7, %8, %cst {dimension_numbers = #tpu.dot_dimension_numbers<[1], [0], [0], [1], [0, 0, 1, 1], [], []>} : vector<2x93xbf16>, vector<93x1024xbf16>, vector<2x1024xf32> -> vector<2x1024xf32>
    %c0_6 = arith.constant 0 : index
    %c0_7 = arith.constant 0 : index
    %10 = vector.load %arg4[%c0_6, %c0_7] : memref<1x1024xf32, #tpu.memory_space<vmem>>, vector<1x1024xf32>
    %11 = vector.broadcast %10 : vector<1x1024xf32> to vector<2x1024xf32>
    %12 = arith.addf %9, %11 : vector<2x1024xf32>
    %c0_8 = arith.constant 0 : index
    %c0_9 = arith.constant 0 : index
    %13 = vector.load %arg5[%c0_8, %c0_9] : memref<256x256xbf16, #tpu.memory_space<vmem>>, vector<256x256xbf16>
    %c0_10 = arith.constant 0 : index
    %c0_11 = arith.constant 0 : index
    %14 = vector.load %arg6[%c0_10, %c0_11] : memref<128x128xbf16, #tpu.memory_space<vmem>>, vector<128x128xbf16>
    %c0_12 = arith.constant 0 : index
    %c0_13 = arith.constant 0 : index
    %15 = vector.load %arg7[%c0_12, %c0_13] : memref<128x128xbf16, #tpu.memory_space<vmem>>, vector<128x128xbf16>
    %cst_14 = arith.constant 0.000000e+00 : bf16
    %16 = vector.broadcast %cst_14 : bf16 to vector<2x256xbf16>
    %cst_15 = arith.constant 0.000000e+00 : bf16
    %17 = vector.broadcast %cst_15 : bf16 to vector<2x128xbf16>
    %18 = vector.extract_strided_slice %12 {offsets = [0, 0], sizes = [2, 256], strides = [1, 1]} : vector<2x1024xf32> to vector<2x256xf32>
    %cst_16 = arith.constant dense<0.000000e+00> : vector<2x256xf32>
    %19 = tpu.matmul %16, %13, %cst_16 {dimension_numbers = #tpu.dot_dimension_numbers<[1], [0], [0], [1], [0, 0, 1, 1], [], []>} : vector<2x256xbf16>, vector<256x256xbf16>, vector<2x256xf32> -> vector<2x256xf32>
    %20 = arith.addf %18, %19 : vector<2x256xf32>
    %21 = arith.truncf %20 : vector<2x256xf32> to vector<2x256xbf16>
    %22 = math.tanh %21 : vector<2x256xbf16>
    %23 = vector.extract_strided_slice %22 {offsets = [0, 128], sizes = [2, 128], strides = [1, 1]} : vector<2x256xbf16> to vector<2x128xbf16>
    %24 = vector.extract_strided_slice %22 {offsets = [0, 0], sizes = [2, 128], strides = [1, 1]} : vector<2x256xbf16> to vector<2x128xbf16>
    %25 = arith.subf %23, %24 : vector<2x128xbf16>
    %cst_17 = arith.constant dense<0.000000e+00> : vector<2x128xf32>
    %26 = tpu.matmul %25, %14, %cst_17 {dimension_numbers = #tpu.dot_dimension_numbers<[1], [0], [0], [1], [0, 0, 1, 1], [], []>} : vector<2x128xbf16>, vector<128x128xbf16>, vector<2x128xf32> -> vector<2x128xf32>
    %c0_18 = arith.constant 0 : index
    %c0_19 = arith.constant 0 : index
    %27 = vector.load %arg8[%c0_18, %c0_19] : memref<4x128xf32, #tpu.memory_space<vmem>>, vector<1x128xf32>
    %28 = vector.broadcast %27 : vector<1x128xf32> to vector<2x128xf32>
    %29 = arith.addf %26, %28 : vector<2x128xf32>
    %cst_20 = arith.constant dense<0.000000e+00> : vector<2x128xf32>
    %30 = tpu.matmul %17, %15, %cst_20 {dimension_numbers = #tpu.dot_dimension_numbers<[1], [0], [0], [1], [0, 0, 1, 1], [], []>} : vector<2x128xbf16>, vector<128x128xbf16>, vector<2x128xf32> -> vector<2x128xf32>
    %31 = arith.addf %29, %30 : vector<2x128xf32>
    %32 = arith.truncf %31 : vector<2x128xf32> to vector<2x128xbf16>
    %33 = math.tanh %32 : vector<2x128xbf16>
    %34 = vector.extract_strided_slice %12 {offsets = [0, 256], sizes = [2, 256], strides = [1, 1]} : vector<2x1024xf32> to vector<2x256xf32>
    %cst_21 = arith.constant dense<0.000000e+00> : vector<2x256xf32>
    %35 = tpu.matmul %22, %13, %cst_21 {dimension_numbers = #tpu.dot_dimension_numbers<[1], [0], [0], [1], [0, 0, 1, 1], [], []>} : vector<2x256xbf16>, vector<256x256xbf16>, vector<2x256xf32> -> vector<2x256xf32>
    %36 = arith.addf %34, %35 : vector<2x256xf32>
    %37 = arith.truncf %36 : vector<2x256xf32> to vector<2x256xbf16>
    %38 = math.tanh %37 : vector<2x256xbf16>
    %39 = vector.extract_strided_slice %38 {offsets = [0, 128], sizes = [2, 128], strides = [1, 1]} : vector<2x256xbf16> to vector<2x128xbf16>
    %40 = vector.extract_strided_slice %38 {offsets = [0, 0], sizes = [2, 128], strides = [1, 1]} : vector<2x256xbf16> to vector<2x128xbf16>
    %41 = arith.subf %39, %40 : vector<2x128xbf16>
    %cst_22 = arith.constant dense<0.000000e+00> : vector<2x128xf32>
    %42 = tpu.matmul %41, %14, %cst_22 {dimension_numbers = #tpu.dot_dimension_numbers<[1], [0], [0], [1], [0, 0, 1, 1], [], []>} : vector<2x128xbf16>, vector<128x128xbf16>, vector<2x128xf32> -> vector<2x128xf32>
    %c1_23 = arith.constant 1 : index
    %c0_24 = arith.constant 0 : index
    %43 = vector.load %arg8[%c1_23, %c0_24] : memref<4x128xf32, #tpu.memory_space<vmem>>, vector<1x128xf32>
    %44 = vector.broadcast %43 : vector<1x128xf32> to vector<2x128xf32>
    %45 = arith.addf %42, %44 : vector<2x128xf32>
    %cst_25 = arith.constant dense<0.000000e+00> : vector<2x128xf32>
    %46 = tpu.matmul %33, %15, %cst_25 {dimension_numbers = #tpu.dot_dimension_numbers<[1], [0], [0], [1], [0, 0, 1, 1], [], []>} : vector<2x128xbf16>, vector<128x128xbf16>, vector<2x128xf32> -> vector<2x128xf32>
    %47 = arith.addf %45, %46 : vector<2x128xf32>
    %48 = arith.truncf %47 : vector<2x128xf32> to vector<2x128xbf16>
    %49 = math.tanh %48 : vector<2x128xbf16>
    %50 = vector.extract_strided_slice %12 {offsets = [0, 512], sizes = [2, 256], strides = [1, 1]} : vector<2x1024xf32> to vector<2x256xf32>
    %cst_26 = arith.constant dense<0.000000e+00> : vector<2x256xf32>
    %51 = tpu.matmul %38, %13, %cst_26 {dimension_numbers = #tpu.dot_dimension_numbers<[1], [0], [0], [1], [0, 0, 1, 1], [], []>} : vector<2x256xbf16>, vector<256x256xbf16>, vector<2x256xf32> -> vector<2x256xf32>
    %52 = arith.addf %50, %51 : vector<2x256xf32>
    %53 = arith.truncf %52 : vector<2x256xf32> to vector<2x256xbf16>
    %54 = math.tanh %53 : vector<2x256xbf16>
    %55 = vector.extract_strided_slice %54 {offsets = [0, 128], sizes = [2, 128], strides = [1, 1]} : vector<2x256xbf16> to vector<2x128xbf16>
    %56 = vector.extract_strided_slice %54 {offsets = [0, 0], sizes = [2, 128], strides = [1, 1]} : vector<2x256xbf16> to vector<2x128xbf16>
    %57 = arith.subf %55, %56 : vector<2x128xbf16>
    %cst_27 = arith.constant dense<0.000000e+00> : vector<2x128xf32>
    %58 = tpu.matmul %57, %14, %cst_27 {dimension_numbers = #tpu.dot_dimension_numbers<[1], [0], [0], [1], [0, 0, 1, 1], [], []>} : vector<2x128xbf16>, vector<128x128xbf16>, vector<2x128xf32> -> vector<2x128xf32>
    %c2 = arith.constant 2 : index
    %c0_28 = arith.constant 0 : index
    %59 = vector.load %arg8[%c2, %c0_28] : memref<4x128xf32, #tpu.memory_space<vmem>>, vector<1x128xf32>
    %60 = vector.broadcast %59 : vector<1x128xf32> to vector<2x128xf32>
    %61 = arith.addf %58, %60 : vector<2x128xf32>
    %cst_29 = arith.constant dense<0.000000e+00> : vector<2x128xf32>
    %62 = tpu.matmul %49, %15, %cst_29 {dimension_numbers = #tpu.dot_dimension_numbers<[1], [0], [0], [1], [0, 0, 1, 1], [], []>} : vector<2x128xbf16>, vector<128x128xbf16>, vector<2x128xf32> -> vector<2x128xf32>
    %63 = arith.addf %61, %62 : vector<2x128xf32>
    %64 = arith.truncf %63 : vector<2x128xf32> to vector<2x128xbf16>
    %65 = math.tanh %64 : vector<2x128xbf16>
    %66 = vector.extract_strided_slice %12 {offsets = [0, 768], sizes = [2, 256], strides = [1, 1]} : vector<2x1024xf32> to vector<2x256xf32>
    %cst_30 = arith.constant dense<0.000000e+00> : vector<2x256xf32>
    %67 = tpu.matmul %54, %13, %cst_30 {dimension_numbers = #tpu.dot_dimension_numbers<[1], [0], [0], [1], [0, 0, 1, 1], [], []>} : vector<2x256xbf16>, vector<256x256xbf16>, vector<2x256xf32> -> vector<2x256xf32>
    %68 = arith.addf %66, %67 : vector<2x256xf32>
    %69 = arith.truncf %68 : vector<2x256xf32> to vector<2x256xbf16>
    %70 = math.tanh %69 : vector<2x256xbf16>
    %71 = vector.extract_strided_slice %70 {offsets = [0, 128], sizes = [2, 128], strides = [1, 1]} : vector<2x256xbf16> to vector<2x128xbf16>
    %72 = vector.extract_strided_slice %70 {offsets = [0, 0], sizes = [2, 128], strides = [1, 1]} : vector<2x256xbf16> to vector<2x128xbf16>
    %73 = arith.subf %71, %72 : vector<2x128xbf16>
    %cst_31 = arith.constant dense<0.000000e+00> : vector<2x128xf32>
    %74 = tpu.matmul %73, %14, %cst_31 {dimension_numbers = #tpu.dot_dimension_numbers<[1], [0], [0], [1], [0, 0, 1, 1], [], []>} : vector<2x128xbf16>, vector<128x128xbf16>, vector<2x128xf32> -> vector<2x128xf32>
    %c3 = arith.constant 3 : index
    %c0_32 = arith.constant 0 : index
    %75 = vector.load %arg8[%c3, %c0_32] : memref<4x128xf32, #tpu.memory_space<vmem>>, vector<1x128xf32>
    %76 = vector.broadcast %75 : vector<1x128xf32> to vector<2x128xf32>
    %77 = arith.addf %74, %76 : vector<2x128xf32>
    %cst_33 = arith.constant dense<0.000000e+00> : vector<2x128xf32>
    %78 = tpu.matmul %65, %15, %cst_33 {dimension_numbers = #tpu.dot_dimension_numbers<[1], [0], [0], [1], [0, 0, 1, 1], [], []>} : vector<2x128xbf16>, vector<128x128xbf16>, vector<2x128xf32> -> vector<2x128xf32>
    %79 = arith.addf %77, %78 : vector<2x128xf32>
    %80 = arith.truncf %79 : vector<2x128xf32> to vector<2x128xbf16>
    %81 = math.tanh %80 : vector<2x128xbf16>
    %82 = tpu.concatenate %33, %49, %65, %81 in 1 : vector<2x128xbf16>, vector<2x128xbf16>, vector<2x128xbf16>, vector<2x128xbf16> -> vector<2x512xbf16>
    %c0_34 = arith.constant 0 : index
    %c0_35 = arith.constant 0 : index
    %83 = vector.load %arg9[%c0_34, %c0_35] : memref<512x64xbf16, #tpu.memory_space<vmem>>, vector<512x64xbf16>
    %cst_36 = arith.constant dense<0.000000e+00> : vector<2x64xf32>
    %84 = tpu.matmul %82, %83, %cst_36 {dimension_numbers = #tpu.dot_dimension_numbers<[1], [0], [0], [1], [0, 0, 1, 1], [], []>} : vector<2x512xbf16>, vector<512x64xbf16>, vector<2x64xf32> -> vector<2x64xf32>
    %c0_37 = arith.constant 0 : index
    %c0_38 = arith.constant 0 : index
    %85 = vector.load %arg10[%c0_37, %c0_38] : memref<1x64xf32, #tpu.memory_space<vmem>>, vector<1x64xf32>
    %86 = vector.broadcast %85 : vector<1x64xf32> to vector<2x64xf32>
    %87 = arith.addf %84, %86 : vector<2x64xf32>
    %cst_39 = arith.constant 0.000000e+00 : f32
    %88 = vector.broadcast %cst_39 : f32 to vector<2x64xf32>
    %89 = arith.maximumf %87, %88 : vector<2x64xf32>
    %c0_40 = arith.constant 0 : index
    %c0_41 = arith.constant 0 : index
    %90 = vector.load %arg11[%c0_40, %c0_41] : memref<2x64xf32, #tpu.memory_space<vmem>>, vector<2x64xf32>
    tpu.vector_store %arg11[%c0_40, %c0_41], %89 {strides = array<i32>} : memref<2x64xf32, #tpu.memory_space<vmem>>, vector<2x64xf32>,
    return
  }
  func.func @transform_0(%arg0: i32) -> (i32, i32) {
    %c0_i32 = arith.constant 0 : i32
    %c0_i32_0 = arith.constant 0 : i32
    return %arg0, %c0_i32 : i32, i32
  }
  func.func @transform_1(%arg0: i32) -> (i32, i32) {
    %c0_i32 = arith.constant 0 : i32
    %c0_i32_0 = arith.constant 0 : i32
    %c0_i32_1 = arith.constant 0 : i32
    return %c0_i32, %c0_i32_0 : i32, i32
  }
  func.func @transform_2(%arg0: i32) -> (i32, i32) {
    %c0_i32 = arith.constant 0 : i32
    %c0_i32_0 = arith.constant 0 : i32
    %c0_i32_1 = arith.constant 0 : i32
    return %c0_i32, %c0_i32_0 : i32, i32
  }
  func.func @transform_3(%arg0: i32) -> (i32, i32) {
    %c0_i32 = arith.constant 0 : i32
    %c0_i32_0 = arith.constant 0 : i32
    %c0_i32_1 = arith.constant 0 : i32
    return %c0_i32, %c0_i32_0 : i32, i32
  }
  func.func @transform_4(%arg0: i32) -> (i32, i32) {
    %c0_i32 = arith.constant 0 : i32
    %c0_i32_0 = arith.constant 0 : i32
    %c0_i32_1 = arith.constant 0 : i32
    return %c0_i32, %c0_i32_0 : i32, i32
  }
  func.func @transform_5(%arg0: i32) -> (i32, i32) {
    %c0_i32 = arith.constant 0 : i32
    %c0_i32_0 = arith.constant 0 : i32
    %c0_i32_1 = arith.constant 0 : i32
    return %c0_i32, %c0_i32_0 : i32, i32
  }
  func.func @transform_6(%arg0: i32) -> (i32, i32) {
    %c0_i32 = arith.constant 0 : i32
    %c0_i32_0 = arith.constant 0 : i32
    %c0_i32_1 = arith.constant 0 : i32
    return %c0_i32, %c0_i32_0 : i32, i32
  }
  func.func @transform_7(%arg0: i32) -> (i32, i32) {
    %c0_i32 = arith.constant 0 : i32
    %c0_i32_0 = arith.constant 0 : i32
    %c0_i32_1 = arith.constant 0 : i32
    return %c0_i32, %c0_i32_0 : i32, i32
  }
  func.func @transform_8(%arg0: i32) -> (i32, i32) {
    %c0_i32 = arith.constant 0 : i32
    %c0_i32_0 = arith.constant 0 : i32
    %c0_i32_1 = arith.constant 0 : i32
    return %c0_i32, %c0_i32_0 : i32, i32
  }
  func.func @transform_9(%arg0: i32) -> (i32, i32) {
    %c0_i32 = arith.constant 0 : i32
    %c0_i32_0 = arith.constant 0 : i32
    %c0_i32_1 = arith.constant 0 : i32
    return %c0_i32, %c0_i32_0 : i32, i32
  }
  func.func @transform_10(%arg0: i32) -> (i32, i32) {
    %c0_i32 = arith.constant 0 : i32
    %c0_i32_0 = arith.constant 0 : i32
    return %arg0, %c0_i32 : i32, i32
  }
}

</mosaic_0001>

<llo_original>
// kernel: tpu_custom_call.1
$region0: #{tpu_custom_call.1}
  #allocation0 [shape = 'u32[]', space=smem, size = 0x4, offset = 0x4, fixed_abs, tag = 'smem constant byte address 0x4 - core index']
  #allocation1 [shape = 'u32[144,128]{1,0:T(1,128)}', space=vmem, size = 0x12000, scoped, tag = 'internal scratch']
  %s0 = inlined_call_operand.hbm [shape: f32[2,93], index: 0, kind: input, shape index: {}]
  %s1 = inlined_call_operand.hbm [shape: f32[2,93], index: 1, kind: input, shape index: {}]
  %s2 = inlined_call_operand.vmem [shape: bf16[93,1024], index: 2, kind: input, shape index: {}]
  %s3 = inlined_call_operand.hbm [shape: f32[1,1024], index: 3, kind: input, shape index: {}]
  %s4 = inlined_call_operand.hbm [shape: bf16[256,256], index: 4, kind: input, shape index: {}]
  %s5 = inlined_call_operand.hbm [shape: bf16[128,128], index: 5, kind: input, shape index: {}]
  %s6 = inlined_call_operand.hbm [shape: bf16[128,128], index: 6, kind: input, shape index: {}]
  %s7 = inlined_call_operand.vmem [shape: f32[4,128], index: 7, kind: input, shape index: {}]
  %s8 = inlined_call_operand.vmem [shape: bf16[512,64], index: 8, kind: input, shape index: {}]
  %s9 = inlined_call_operand.vmem [shape: f32[1,64], index: 9, kind: input, shape index: {}]
  %s10 = inlined_call_operand.hbm [shape: f32[2,64], index: 10, kind: output, shape index: {}]
  %s11 = sld [smem:[#allocation0]]
  $region74: #{tpu_custom_call.1} parent=0
    _
  %s13 = ssub.s32 1, %s11
  %s14 = scalar_select 0, %s13, %s11
  $region1: #{tpu_custom_call.1} parent=0
    #allocation2 [shape = 'u8[1024]{0}', space=vmem, size = 0x400, scoped, tag = 'input window, operand 0, single buffered']
    #allocation3 [shape = 's32[1]{0}', space=sflag, size = 0x4, scoped, tag = 'scoped memory for tpu_custom_call.1']
    #allocation4 [shape = 's32[1]{0}', space=sflag, size = 0x4, scoped, tag = 'scoped memory for tpu_custom_call.1']
    #allocation5 [shape = 'u8[1024]{0}', space=vmem, size = 0x400, scoped, tag = 'input window, operand 1, single buffered']
    #allocation6 [shape = 's32[1]{0}', space=sflag, size = 0x4, scoped, tag = 'scoped memory for tpu_custom_call.1']
    #allocation7 [shape = 'u8[4096]{0}', space=vmem, size = 0x1000, scoped, tag = 'input window, operand 3, single buffered']
    #allocation8 [shape = 'u8[131072]{0}', space=vmem, size = 0x20000, scoped, tag = 'input window, operand 4, single buffered']
    #allocation9 [shape = 's32[1]{0}', space=sflag, size = 0x4, scoped, tag = 'scoped memory for tpu_custom_call.1']
    #allocation10 [shape = 'u8[32768]{0}', space=vmem, size = 0x8000, scoped, tag = 'input window, operand 5, single buffered']
    #allocation11 [shape = 'u8[32768]{0}', space=vmem, size = 0x8000, scoped, tag = 'input window, operand 6, single buffered']
    #allocation12 [shape = 's32[1]{0}', space=sflag, size = 0x4, scoped, tag = 'scoped memory for tpu_custom_call.1']
    #allocation13 [shape = 'u8[1024]{0}', space=vmem, size = 0x400, scoped, tag = 'output window, operand 0, single buffered']
    %15 = vsyncpa [#allocation3], 0
    %16 = vsyncpa [#allocation6], 0
    %17 = vsyncpa [#allocation9], 0
    %18 = vsyncpa [#allocation12], 0
    %19 = vsyncpa [#allocation4], 0
    // Predicated region
    $region2: #{tpu_custom_call.1} parent=1 // pred_check
      _
    $region3: #{tpu_custom_call.1} parent=1 // pred_check_branch
      %21 = sbr.rel (0) target = $region5
    $region4: #{tpu_custom_call.1} parent=1 // pred_region
      %s23 = ssub.s32 32, 32
      %24 = vsyncadd [#allocation3], %s23
      %s26 = sshll.u32 [#allocation2], 4
      %s27 = int_to_ptr.vmem [resolvable:$true] %s26
      %29 = dma.hbm_to_vmem [thread:$0]  %s0, 32, %s27, [#allocation3]
    $region5: #{tpu_custom_call.1} parent=1 // pred_fallthru
      _
    // Predicated region
    $region6: #{tpu_custom_call.1} parent=1 // pred_check
      _
    $region7: #{tpu_custom_call.1} parent=1 // pred_check_branch
      %31 = sbr.rel (0) target = $region9
    $region8: #{tpu_custom_call.1} parent=1 // pred_region
      %s33 = ssub.s32 32, 32
      %34 = vsyncadd [#allocation6], %s33
      %s36 = sshll.u32 [#allocation5], 4
      %s37 = int_to_ptr.vmem [resolvable:$true] %s36
      %39 = dma.hbm_to_vmem [thread:$0]  %s1, 32, %s37, [#allocation6]
    $region9: #{tpu_custom_call.1} parent=1 // pred_fallthru
      _
    // Predicated region
    $region10: #{tpu_custom_call.1} parent=1 // pred_check
      _
    $region11: #{tpu_custom_call.1} parent=1 // pred_check_branch
      %41 = sbr.rel (0) target = $region13
    $region12: #{tpu_custom_call.1} parent=1 // pred_region
      _
    $region13: #{tpu_custom_call.1} parent=1 // pred_fallthru
      _
    // Predicated region
    $region14: #{tpu_custom_call.1} parent=1 // pred_check
      _
    $region15: #{tpu_custom_call.1} parent=1 // pred_check_branch
      %43 = sbr.rel (0) target = $region17
    $region16: #{tpu_custom_call.1} parent=1 // pred_region
      %s45 = ssub.s32 128, 128
      %46 = vsyncadd [#allocation6], %s45
      %s48 = sshll.u32 [#allocation7], 4
      %s49 = int_to_ptr.vmem [resolvable:$true] %s48
      %51 = dma.hbm_to_vmem [thread:$0]  %s3, 128, %s49, [#allocation6]
    $region17: #{tpu_custom_call.1} parent=1 // pred_fallthru
      _
    // Predicated region
    $region18: #{tpu_custom_call.1} parent=1 // pred_check
      _
    $region19: #{tpu_custom_call.1} parent=1 // pred_check_branch
      %53 = sbr.rel (0) target = $region21
    $region20: #{tpu_custom_call.1} parent=1 // pred_region
      %s55 = ssub.s32 4096, 4096
      %56 = vsyncadd [#allocation9], %s55
      %s57 = sshll.u32 [#allocation8], 4
      %s58 = int_to_ptr.vmem [resolvable:$true] %s57
      %63 = dma.hbm_to_vmem [thread:$0]  %s4, 4096, %s58, [#allocation9], 128, 128, 8
    $region21: #{tpu_custom_call.1} parent=1 // pred_fallthru
      _
    // Predicated region
    $region22: #{tpu_custom_call.1} parent=1 // pred_check
      _
    $region23: #{tpu_custom_call.1} parent=1 // pred_check_branch
      %65 = sbr.rel (0) target = $region25
    $region24: #{tpu_custom_call.1} parent=1 // pred_region
      %s67 = ssub.s32 1024, 1024
      %68 = vsyncadd [#allocation9], %s67
      %s69 = sshll.u32 [#allocation10], 4
      %s70 = int_to_ptr.vmem [resolvable:$true] %s69
      %75 = dma.hbm_to_vmem [thread:$0]  %s5, 1024, %s70, [#allocation9], 64, 64, 4
    $region25: #{tpu_custom_call.1} parent=1 // pred_fallthru
      _
    // Predicated region
    $region26: #{tpu_custom_call.1} parent=1 // pred_check
      _
    $region27: #{tpu_custom_call.1} parent=1 // pred_check_branch
      %77 = sbr.rel (0) target = $region29
    $region28: #{tpu_custom_call.1} parent=1 // pred_region
      %s79 = ssub.s32 1024, 1024
      %80 = vsyncadd [#allocation12], %s79
      %s81 = sshll.u32 [#allocation11], 4
      %s82 = int_to_ptr.vmem [resolvable:$true] %s81
      %87 = dma.hbm_to_vmem [thread:$0]  %s6, 1024, %s82, [#allocation12], 64, 64, 4
    $region29: #{tpu_custom_call.1} parent=1 // pred_fallthru
      _
    // Predicated region
    $region30: #{tpu_custom_call.1} parent=1 // pred_check
      _
    $region31: #{tpu_custom_call.1} parent=1 // pred_check_branch
      %89 = sbr.rel (0) target = $region33
    $region32: #{tpu_custom_call.1} parent=1 // pred_region
      _
    $region33: #{tpu_custom_call.1} parent=1 // pred_fallthru
      _
    // Predicated region
    $region34: #{tpu_custom_call.1} parent=1 // pred_check
      _
    $region35: #{tpu_custom_call.1} parent=1 // pred_check_branch
      %91 = sbr.rel (0) target = $region37
    $region36: #{tpu_custom_call.1} parent=1 // pred_region
      _
    $region37: #{tpu_custom_call.1} parent=1 // pred_fallthru
      _
    // Predicated region
    $region38: #{tpu_custom_call.1} parent=1 // pred_check
      _
    $region39: #{tpu_custom_call.1} parent=1 // pred_check_branch
      %93 = sbr.rel (0) target = $region41
    $region40: #{tpu_custom_call.1} parent=1 // pred_region
      _
    $region41: #{tpu_custom_call.1} parent=1 // pred_fallthru
      _
    // Predicated region
    $region42: #{tpu_custom_call.1} parent=1 // pred_check
      _
    $region43: #{tpu_custom_call.1} parent=1 // pred_check_branch
      %95 = sbr.rel (0) target = $region45
    $region44: #{tpu_custom_call.1} parent=1 // pred_region
      %96 = dma.done [#allocation3], 32
    $region45: #{tpu_custom_call.1} parent=1 // pred_fallthru
      _
    // Predicated region
    $region46: #{tpu_custom_call.1} parent=1 // pred_check
      _
    $region47: #{tpu_custom_call.1} parent=1 // pred_check_branch
      %98 = sbr.rel (0) target = $region49
    $region48: #{tpu_custom_call.1} parent=1 // pred_region
      %99 = dma.done [#allocation6], 32
    $region49: #{tpu_custom_call.1} parent=1 // pred_fallthru
      _
    // Predicated region
    $region50: #{tpu_custom_call.1} parent=1 // pred_check
      _
    $region51: #{tpu_custom_call.1} parent=1 // pred_check_branch
      %101 = sbr.rel (0) target = $region53
    $region52: #{tpu_custom_call.1} parent=1 // pred_region
      %102 = dma.done [#allocation6], 128
    $region53: #{tpu_custom_call.1} parent=1 // pred_fallthru
      _
    // Predicated region
    $region54: #{tpu_custom_call.1} parent=1 // pred_check
      _
    $region55: #{tpu_custom_call.1} parent=1 // pred_check_branch
      %104 = sbr.rel (0) target = $region57
    $region56: #{tpu_custom_call.1} parent=1 // pred_region
      %105 = dma.done [#allocation9], 4096
    $region57: #{tpu_custom_call.1} parent=1 // pred_fallthru
      _
    // Predicated region
    $region58: #{tpu_custom_call.1} parent=1 // pred_check
      _
    $region59: #{tpu_custom_call.1} parent=1 // pred_check_branch
      %107 = sbr.rel (0) target = $region61
    $region60: #{tpu_custom_call.1} parent=1 // pred_region
      %108 = dma.done [#allocation9], 1024
    $region61: #{tpu_custom_call.1} parent=1 // pred_fallthru
      _
    // Predicated region
    $region62: #{tpu_custom_call.1} parent=1 // pred_check
      _
    $region63: #{tpu_custom_call.1} parent=1 // pred_check_branch
      %110 = sbr.rel (0) target = $region65
    $region64: #{tpu_custom_call.1} parent=1 // pred_region
      %111 = dma.done [#allocation12], 1024
    $region65: #{tpu_custom_call.1} parent=1 // pred_fallthru
      _
    %v113 = vld [vmem:[#allocation2] sm:$0x3]
    %v114 = vld [vmem:[#allocation5] sm:$0x1]
    %v115 = vlaneseq
    %v116 = vshrl.u32 %v115, 7
    %v117 = vsub.s32 0, %v116
    %v118 = vrot.slane %v114, %v117
    %v119 = vmul.f32 %v113, %v118
    %v120 = vld [vmem:[#allocation5 + $0x1] sm:$0x1]
    %v121 = vlaneseq
    %v122 = vshrl.u32 %v121, 7
    %v123 = vsub.s32 0, %v122
    %v124 = vrot.slane %v120, %v123
    %v125 = vadd.f32 %v119, %v124
    %v126 = vpack.c.bf16 %v125, %v125
    %v127 = vld [vmem:[%s2] sm:$0xff]
    %v128 = vld [vmem:[%s2 + $0x8] sm:$0xff]
    %v129 = vld [vmem:[%s2 + $0x10] sm:$0xff]
    %v130 = vld [vmem:[%s2 + $0x18] sm:$0xff]
    %v131 = vld [vmem:[%s2 + $0x20] sm:$0xff]
    %v132 = vld [vmem:[%s2 + $0x28] sm:$0xff]
    %v133 = vld [vmem:[%s2 + $0x30] sm:$0xff]
    %v134 = vld [vmem:[%s2 + $0x38] sm:$0xff]
    %v135 = vld [vmem:[%s2 + $0x40] sm:$0xff]
    %v136 = vld [vmem:[%s2 + $0x48] sm:$0xff]
    %v137 = vld [vmem:[%s2 + $0x50] sm:$0xff]
    %v138 = vld [vmem:[%s2 + $0x58] sm:$0xff]
    %v139 = vld [vmem:[%s2 + $0x60] sm:$0xff]
    %v140 = vld [vmem:[%s2 + $0x68] sm:$0xff]
    %v141 = vld [vmem:[%s2 + $0x70] sm:$0xff]
    %v142 = vld [vmem:[%s2 + $0x78] sm:$0xff]
    %v143 = vld [vmem:[%s2 + $0x80] sm:$0xff]
    %v144 = vld [vmem:[%s2 + $0x88] sm:$0xff]
    %v145 = vld [vmem:[%s2 + $0x90] sm:$0xff]
    %v146 = vld [vmem:[%s2 + $0x98] sm:$0xff]
    %v147 = vld [vmem:[%s2 + $0xa0] sm:$0xff]
    %v148 = vld [vmem:[%s2 + $0xa8] sm:$0xff]
    %v149 = vld [vmem:[%s2 + $0xb0] sm:$0xff]
    %v150 = vld [vmem:[%s2 + $0xb8] sm:$0xff]
    %v151 = vld [vmem:[%s2 + $0xc0] sm:$0xff]
    %v152 = vld [vmem:[%s2 + $0xc8] sm:$0xff]
    %v153 = vld [vmem:[%s2 + $0xd0] sm:$0xff]
    %v154 = vld [vmem:[%s2 + $0xd8] sm:$0xff]
    %v155 = vld [vmem:[%s2 + $0xe0] sm:$0xff]
    %v156 = vld [vmem:[%s2 + $0xe8] sm:$0xff]
    %v157 = vld [vmem:[%s2 + $0xf0] sm:$0xff]
    %v158 = vld [vmem:[%s2 + $0xf8] sm:$0xff]
    %v159 = vld [vmem:[%s2 + $0x100] sm:$0xff]
    %v160 = vld [vmem:[%s2 + $0x108] sm:$0xff]
    %v161 = vld [vmem:[%s2 + $0x110] sm:$0xff]
    %v162 = vld [vmem:[%s2 + $0x118] sm:$0xff]
    %v163 = vld [vmem:[%s2 + $0x120] sm:$0xff]
    %v164 = vld [vmem:[%s2 + $0x128] sm:$0xff]
    %v165 = vld [vmem:[%s2 + $0x130] sm:$0xff]
    %v166 = vld [vmem:[%s2 + $0x138] sm:$0xff]
    %v167 = vld [vmem:[%s2 + $0x140] sm:$0xff]
    %v168 = vld [vmem:[%s2 + $0x148] sm:$0xff]
    %v169 = vld [vmem:[%s2 + $0x150] sm:$0xff]
    %v170 = vld [vmem:[%s2 + $0x158] sm:$0xff]
    %v171 = vld [vmem:[%s2 + $0x160] sm:$0x77]
    %v172 = vld [vmem:[%s2 + $0x168] sm:$0x77]
    %v173 = vld [vmem:[%s2 + $0x170] sm:$0x77]
    %v174 = vld [vmem:[%s2 + $0x178] sm:$0x77]
    %v175 = vld [vmem:[#allocation7] sm:$0xff]
    %v177 = vlaneseq
    %v178 = vshrl.u32 %v177, 7
    %v179 = vsub.s32 0, %v178
    %v180 = vrot.slane %v175, %v179
    %v181 = vlaneseq
    %v182 = vshrl.u32 %v181, 7
    %v183 = vsub.s32 1, %v182
    %v184 = vrot.slane %v175, %v183
    %v185 = vlaneseq
    %v186 = vshrl.u32 %v185, 7
    %v187 = vsub.s32 2, %v186
    %v188 = vrot.slane %v175, %v187
    %v189 = vlaneseq
    %v190 = vshrl.u32 %v189, 7
    %v191 = vsub.s32 3, %v190
    %v192 = vrot.slane %v175, %v191
    %v193 = vlaneseq
    %v194 = vshrl.u32 %v193, 7
    %v195 = vsub.s32 4, %v194
    %v196 = vrot.slane %v175, %v195
    %v197 = vlaneseq
    %v198 = vshrl.u32 %v197, 7
    %v199 = vsub.s32 5, %v198
    %v200 = vrot.slane %v175, %v199
    %v201 = vlaneseq
    %v202 = vshrl.u32 %v201, 7
    %v203 = vsub.s32 6, %v202
    %v204 = vrot.slane %v175, %v203
    %v205 = vlaneseq
    %v206 = vshrl.u32 %v205, 7
    %v207 = vsub.s32 7, %v206
    %v208 = vrot.slane %v175, %v207
    %v265 = vunpack.c.l.b16 %v127
    %v266 = vunpack.c.h.b16 %v127
    %v267 = vunpack.c.l.b16 %v128
    %v268 = vunpack.c.h.b16 %v128
    %v269 = vunpack.c.l.b16 %v129
    %v270 = vunpack.c.h.b16 %v129
    %v271 = vunpack.c.l.b16 %v130
    %v272 = vunpack.c.h.b16 %v130
    %v273 = vunpack.c.l.b16 %v131
    %v274 = vunpack.c.h.b16 %v131
    %v275 = vunpack.c.l.b16 %v132
    %v276 = vunpack.c.h.b16 %v132
    %v277 = vunpack.c.l.b16 %v133
    %v278 = vunpack.c.h.b16 %v133
    %v279 = vunpack.c.l.b16 %v134
    %v280 = vunpack.c.h.b16 %v134
    %v281 = vunpack.c.l.b16 %v135
    %v282 = vunpack.c.h.b16 %v135
    %v283 = vunpack.c.l.b16 %v136
    %v284 = vunpack.c.h.b16 %v136
    %v285 = vunpack.c.l.b16 %v137
    %v286 = vunpack.c.h.b16 %v137
    %v287 = vunpack.c.l.b16 %v138
    %v288 = vunpack.c.h.b16 %v138
    %v289 = vunpack.c.l.b16 %v139
    %v290 = vunpack.c.h.b16 %v139
    %v291 = vunpack.c.l.b16 %v140
    %v292 = vunpack.c.h.b16 %v140
    %v293 = vunpack.c.l.b16 %v141
    %v294 = vunpack.c.h.b16 %v141
    %v295 = vunpack.c.l.b16 %v142
    %v296 = vunpack.c.h.b16 %v142
    %v297 = vunpack.c.l.b16 %v143
    %v298 = vunpack.c.h.b16 %v143
    %v299 = vunpack.c.l.b16 %v144
    %v300 = vunpack.c.h.b16 %v144
    %v301 = vunpack.c.l.b16 %v145
    %v302 = vunpack.c.h.b16 %v145
    %v303 = vunpack.c.l.b16 %v146
    %v304 = vunpack.c.h.b16 %v146
    %v305 = vunpack.c.l.b16 %v147
    %v306 = vunpack.c.h.b16 %v147
    %v307 = vunpack.c.l.b16 %v148
    %v308 = vunpack.c.h.b16 %v148
    %v309 = vunpack.c.l.b16 %v149
    %v310 = vunpack.c.h.b16 %v149
    %v311 = vunpack.c.l.b16 %v150
    %v312 = vunpack.c.h.b16 %v150
    %v313 = vunpack.c.l.b16 %v151
    %v314 = vunpack.c.h.b16 %v151
    %v315 = vunpack.c.l.b16 %v152
    %v316 = vunpack.c.h.b16 %v152
    %v317 = vunpack.c.l.b16 %v153
    %v318 = vunpack.c.h.b16 %v153
    %v319 = vunpack.c.l.b16 %v154
    %v320 = vunpack.c.h.b16 %v154
    %v321 = vunpack.c.l.b16 %v155
    %v322 = vunpack.c.h.b16 %v155
    %v323 = vunpack.c.l.b16 %v156
    %v324 = vunpack.c.h.b16 %v156
    %v325 = vunpack.c.l.b16 %v157
    %v326 = vunpack.c.h.b16 %v157
    %v327 = vunpack.c.l.b16 %v158
    %v328 = vunpack.c.h.b16 %v158
    %v329 = vunpack.c.l.b16 %v159
    %v330 = vunpack.c.h.b16 %v159
    %v331 = vunpack.c.l.b16 %v160
    %v332 = vunpack.c.h.b16 %v160
    %v333 = vunpack.c.l.b16 %v161
    %v334 = vunpack.c.h.b16 %v161
    %v335 = vunpack.c.l.b16 %v162
    %v336 = vunpack.c.h.b16 %v162
    %v337 = vunpack.c.l.b16 %v163
    %v338 = vunpack.c.h.b16 %v163
    %v339 = vunpack.c.l.b16 %v164
    %v340 = vunpack.c.h.b16 %v164
    %v341 = vunpack.c.l.b16 %v165
    %v342 = vunpack.c.h.b16 %v165
    %v343 = vunpack.c.l.b16 %v166
    %v344 = vunpack.c.h.b16 %v166
    %v345 = vunpack.c.l.b16 %v167
    %v346 = vunpack.c.h.b16 %v167
    %v347 = vunpack.c.l.b16 %v168
    %v348 = vunpack.c.h.b16 %v168
    %v349 = vunpack.c.l.b16 %v169
    %v350 = vunpack.c.h.b16 %v169
    %v351 = vunpack.c.l.b16 %v170
    %v352 = vunpack.c.h.b16 %v170
    %v353 = vunpack.c.l.b16 %v171
    %v354 = vunpack.c.h.b16 %v171
    %v355 = vunpack.c.l.b16 %v172
    %v356 = vunpack.c.h.b16 %v172
    %v357 = vunpack.c.l.b16 %v173
    %v358 = vunpack.c.h.b16 %v173
    %v359 = vunpack.c.l.b16 %v174
    %v360 = vunpack.c.h.b16 %v174
    %v361 = vpack.c.b16 %v273, %v265
    %v362 = vpack.c.b16 %v274, %v266
    %v363 = vpack.c.b16 %v275, %v267
    %v364 = vpack.c.b16 %v276, %v268
    %v365 = vpack.c.b16 %v277, %v269
    %v366 = vpack.c.b16 %v278, %v270
    %v367 = vpack.c.b16 %v279, %v271
    %v368 = vpack.c.b16 %v280, %v272
    %v369 = vpack.c.b16 %v289, %v281
    %v370 = vpack.c.b16 %v290, %v282
    %v371 = vpack.c.b16 %v291, %v283
    %v372 = vpack.c.b16 %v292, %v284
    %v373 = vpack.c.b16 %v293, %v285
    %v374 = vpack.c.b16 %v294, %v286
    %v375 = vpack.c.b16 %v295, %v287
    %v376 = vpack.c.b16 %v296, %v288
    %v377 = vpack.c.b16 %v305, %v297
    %v378 = vpack.c.b16 %v306, %v298
    %v379 = vpack.c.b16 %v307, %v299
    %v380 = vpack.c.b16 %v308, %v300
    %v381 = vpack.c.b16 %v309, %v301
    %v382 = vpack.c.b16 %v310, %v302
    %v383 = vpack.c.b16 %v311, %v303
    %v384 = vpack.c.b16 %v312, %v304
    %v385 = vpack.c.b16 %v321, %v313
    %v386 = vpack.c.b16 %v322, %v314
    %v387 = vpack.c.b16 %v323, %v315
    %v388 = vpack.c.b16 %v324, %v316
    %v389 = vpack.c.b16 %v325, %v317
    %v390 = vpack.c.b16 %v326, %v318
    %v391 = vpack.c.b16 %v327, %v319
    %v392 = vpack.c.b16 %v328, %v320
    %v393 = vpack.c.b16 %v337, %v329
    %v394 = vpack.c.b16 %v338, %v330
    %v395 = vpack.c.b16 %v339, %v331
    %v396 = vpack.c.b16 %v340, %v332
    %v397 = vpack.c.b16 %v341, %v333
    %v398 = vpack.c.b16 %v342, %v334
    %v399 = vpack.c.b16 %v343, %v335
    %v400 = vpack.c.b16 %v344, %v336
    %v401 = vpack.c.b16 %v353, %v345
    %v402 = vpack.c.b16 %v354, %v346
    %v403 = vpack.c.b16 %v355, %v347
    %v404 = vpack.c.b16 %v356, %v348
    %v405 = vpack.c.b16 %v357, %v349
    %v406 = vpack.c.b16 %v358, %v350
    %v407 = vpack.c.b16 %v359, %v351
    %v408 = vpack.c.b16 %v360, %v352
    %vm449 = vcmask 760832
    %v451 = vsel %vm449, %v126, 0
    %vm453 = vcmask 1045504
    %vm454 = vcmask 1046528
    %v455 = vsel %vm453, 4294967295, 65535
    %v456 = vsel %vm454, %v455, 0
    %v458 = vand.u32 %v401, %v456
    %v461 = vand.u32 %v402, %v456
    %v464 = vand.u32 %v403, %v456
    %v467 = vand.u32 %v404, %v456
    %v470 = vand.u32 %v405, %v456
    %v473 = vand.u32 %v406, %v456
    %v476 = vand.u32 %v407, %v456
    %v479 = vand.u32 %v408, %v456
    %481 = vmatprep.subr.bf16.mxu0 0
    %482 = vmatpush1.bf16.msra.mxu0 0
    %483 = vmatprep.subr.bf16.mxu0 0
    %484 = vmatpush1.bf16.msra.mxu0 0
    %485 = vmatprep.subr.bf16.mxu0 %v461
    %486 = vmatpush1.bf16.msra.mxu0 %v458
    %487 = vmatprep.subr.bf16.mxu0 %v394
    %488 = vmatpush1.bf16.msra.mxu0 %v393
    %489 = vmatprep.subr.bf16.mxu0 %v386
    %490 = vmatpush1.bf16.msra.mxu0 %v385
    %491 = vmatprep.subr.bf16.mxu0 %v378
    %492 = vmatpush1.bf16.msra.mxu0 %v377
    %493 = vmatprep.subr.bf16.mxu0 %v370
    %494 = vmatpush1.bf16.msra.mxu0 %v369
    %495 = vmatprep.subr.bf16.mxu0 %v362
    %496 = vmatpush1.bf16.msra.mxu0 %v361
    %497 = vmatprep.subr.bf16.mxu0 0
    %498 = vmatpush2.bf16.msra.mxu0 0
    %499 = vmatprep.subr.bf16.mxu0 0
    %500 = vmatpush2.bf16.msra.mxu0 0
    %501 = vmatprep.subr.bf16.mxu0 0
    %502 = vmatpush2.bf16.msra.mxu0 0
    %503 = vmatprep.subr.bf16.mxu0 0
    %504 = vmatpush2.bf16.msra.mxu0 0
    %505 = vmatprep.subr.bf16.mxu0 0
    %506 = vmatpush2.bf16.msra.mxu0 0
    %507 = vmatprep.subr.bf16.mxu0 0
    %508 = vmatpush2.bf16.msra.mxu0 0
    %509 = vmatprep.subr.bf16.mxu0 0
    %510 = vmatpush2.bf16.msra.mxu0 0
    %511 = vmatprep.subr.bf16.mxu0 0
    %512 = vmatpush2.bf16.msra.mxu0 0
    %513 = vmatprep.mubr.bf16.mxu0 0
    %514 = vmatmul.mubr.bf16.gmra.mxu0 %v451
    %v515 = vpop.f32.mrf.mxu0
    %v516 = vadd.f32 %v180, %v515
    %v517 = vpop.f32.mrf.mxu0
    %v518 = vadd.f32 %v184, %v517
    %v519 = vpop.f32.mrf.mxu0
    %v520 = vpop.f32.mrf.mxu0
    %521 = vdwg.mxu0
    %522 = vmatprep.subr.bf16.mxu0 0
    %523 = vmatpush1.bf16.msra.mxu0 0
    %524 = vmatprep.subr.bf16.mxu0 0
    %525 = vmatpush1.bf16.msra.mxu0 0
    %526 = vmatprep.subr.bf16.mxu0 %v467
    %527 = vmatpush1.bf16.msra.mxu0 %v464
    %528 = vmatprep.subr.bf16.mxu0 %v396
    %529 = vmatpush1.bf16.msra.mxu0 %v395
    %530 = vmatprep.subr.bf16.mxu0 %v388
    %531 = vmatpush1.bf16.msra.mxu0 %v387
    %532 = vmatprep.subr.bf16.mxu0 %v380
    %533 = vmatpush1.bf16.msra.mxu0 %v379
    %534 = vmatprep.subr.bf16.mxu0 %v372
    %535 = vmatpush1.bf16.msra.mxu0 %v371
    %536 = vmatprep.subr.bf16.mxu0 %v364
    %537 = vmatpush1.bf16.msra.mxu0 %v363
    %538 = vmatprep.subr.bf16.mxu0 0
    %539 = vmatpush2.bf16.msra.mxu0 0
    %540 = vmatprep.subr.bf16.mxu0 0
    %541 = vmatpush2.bf16.msra.mxu0 0
    %542 = vmatprep.subr.bf16.mxu0 0
    %543 = vmatpush2.bf16.msra.mxu0 0
    %544 = vmatprep.subr.bf16.mxu0 0
    %545 = vmatpush2.bf16.msra.mxu0 0
    %546 = vmatprep.subr.bf16.mxu0 0
    %547 = vmatpush2.bf16.msra.mxu0 0
    %548 = vmatprep.subr.bf16.mxu0 0
    %549 = vmatpush2.bf16.msra.mxu0 0
    %550 = vmatprep.subr.bf16.mxu0 0
    %551 = vmatpush2.bf16.msra.mxu0 0
    %552 = vmatprep.subr.bf16.mxu0 0
    %553 = vmatpush2.bf16.msra.mxu0 0
    %554 = vmatprep.mubr.bf16.mxu0 0
    %555 = vmatmul.mubr.bf16.gmra.mxu0 %v451
    %v556 = vpop.f32.mrf.mxu0
    %v557 = vadd.f32 %v188, %v556
    %v558 = vpop.f32.mrf.mxu0
    %v559 = vadd.f32 %v192, %v558
    %v560 = vpop.f32.mrf.mxu0
    %v561 = vpop.f32.mrf.mxu0
    %562 = vdwg.mxu0
    %563 = vmatprep.subr.bf16.mxu0 0
    %564 = vmatpush1.bf16.msra.mxu0 0
    %565 = vmatprep.subr.bf16.mxu0 0
    %566 = vmatpush1.bf16.msra.mxu0 0
    %567 = vmatprep.subr.bf16.mxu0 %v473
    %568 = vmatpush1.bf16.msra.mxu0 %v470
    %569 = vmatprep.subr.bf16.mxu0 %v398
    %570 = vmatpush1.bf16.msra.mxu0 %v397
    %571 = vmatprep.subr.bf16.mxu0 %v390
    %572 = vmatpush1.bf16.msra.mxu0 %v389
    %573 = vmatprep.subr.bf16.mxu0 %v382
    %574 = vmatpush1.bf16.msra.mxu0 %v381
    %575 = vmatprep.subr.bf16.mxu0 %v374
    %576 = vmatpush1.bf16.msra.mxu0 %v373
    %577 = vmatprep.subr.bf16.mxu0 %v366
    %578 = vmatpush1.bf16.msra.mxu0 %v365
    %579 = vmatprep.subr.bf16.mxu0 0
    %580 = vmatpush2.bf16.msra.mxu0 0
    %581 = vmatprep.subr.bf16.mxu0 0
    %582 = vmatpush2.bf16.msra.mxu0 0
    %583 = vmatprep.subr.bf16.mxu0 0
    %584 = vmatpush2.bf16.msra.mxu0 0
    %585 = vmatprep.subr.bf16.mxu0 0
    %586 = vmatpush2.bf16.msra.mxu0 0
    %587 = vmatprep.subr.bf16.mxu0 0
    %588 = vmatpush2.bf16.msra.mxu0 0
    %589 = vmatprep.subr.bf16.mxu0 0
    %590 = vmatpush2.bf16.msra.mxu0 0
    %591 = vmatprep.subr.bf16.mxu0 0
    %592 = vmatpush2.bf16.msra.mxu0 0
    %593 = vmatprep.subr.bf16.mxu0 0
    %594 = vmatpush2.bf16.msra.mxu0 0
    %595 = vmatprep.mubr.bf16.mxu0 0
    %596 = vmatmul.mubr.bf16.gmra.mxu0 %v451
    %v597 = vpop.f32.mrf.mxu0
    %v598 = vadd.f32 %v196, %v597
    %v599 = vpop.f32.mrf.mxu0
    %v600 = vadd.f32 %v200, %v599
    %v601 = vpop.f32.mrf.mxu0
    %v602 = vpop.f32.mrf.mxu0
    %603 = vdwg.mxu0
    %604 = vmatprep.subr.bf16.mxu0 0
    %605 = vmatpush1.bf16.msra.mxu0 0
    %606 = vmatprep.subr.bf16.mxu0 0
    %607 = vmatpush1.bf16.msra.mxu0 0
    %608 = vmatprep.subr.bf16.mxu0 %v479
    %609 = vmatpush1.bf16.msra.mxu0 %v476
    %610 = vmatprep.subr.bf16.mxu0 %v400
    %611 = vmatpush1.bf16.msra.mxu0 %v399
    %612 = vmatprep.subr.bf16.mxu0 %v392
    %613 = vmatpush1.bf16.msra.mxu0 %v391
    %614 = vmatprep.subr.bf16.mxu0 %v384
    %615 = vmatpush1.bf16.msra.mxu0 %v383
    %616 = vmatprep.subr.bf16.mxu0 %v376
    %617 = vmatpush1.bf16.msra.mxu0 %v375
    %618 = vmatprep.subr.bf16.mxu0 %v368
    %619 = vmatpush1.bf16.msra.mxu0 %v367
    %620 = vmatprep.subr.bf16.mxu0 0
    %621 = vmatpush2.bf16.msra.mxu0 0
    %622 = vmatprep.subr.bf16.mxu0 0
    %623 = vmatpush2.bf16.msra.mxu0 0
    %624 = vmatprep.subr.bf16.mxu0 0
    %625 = vmatpush2.bf16.msra.mxu0 0
    %626 = vmatprep.subr.bf16.mxu0 0
    %627 = vmatpush2.bf16.msra.mxu0 0
    %628 = vmatprep.subr.bf16.mxu0 0
    %629 = vmatpush2.bf16.msra.mxu0 0
    %630 = vmatprep.subr.bf16.mxu0 0
    %631 = vmatpush2.bf16.msra.mxu0 0
    %632 = vmatprep.subr.bf16.mxu0 0
    %633 = vmatpush2.bf16.msra.mxu0 0
    %634 = vmatprep.subr.bf16.mxu0 0
    %635 = vmatpush2.bf16.msra.mxu0 0
    %636 = vmatprep.mubr.bf16.mxu0 0
    %637 = vmatmul.mubr.bf16.gmra.mxu0 %v451
    %v638 = vpop.f32.mrf.mxu0
    %v639 = vadd.f32 %v204, %v638
    %v640 = vpop.f32.mrf.mxu0
    %v641 = vadd.f32 %v208, %v640
    %v642 = vpop.f32.mrf.mxu0
    %v643 = vpop.f32.mrf.mxu0
    %644 = vdwg.mxu0
    %v645 = vld [vmem:[#allocation8] sm:$0xff]
    %v646 = vld [vmem:[#allocation8 + $0x8] sm:$0xff]
    %v647 = vld [vmem:[#allocation8 + $0x10] sm:$0xff]
    %v648 = vld [vmem:[#allocation8 + $0x18] sm:$0xff]
    %v649 = vld [vmem:[#allocation8 + $0x20] sm:$0xff]
    %v650 = vld [vmem:[#allocation8 + $0x28] sm:$0xff]
    %v651 = vld [vmem:[#allocation8 + $0x30] sm:$0xff]
    %v652 = vld [vmem:[#allocation8 + $0x38] sm:$0xff]
    %v653 = vld [vmem:[#allocation8 + $0x40] sm:$0xff]
    %v654 = vld [vmem:[#allocation8 + $0x48] sm:$0xff]
    %v655 = vld [vmem:[#allocation8 + $0x50] sm:$0xff]
    %v656 = vld [vmem:[#allocation8 + $0x58] sm:$0xff]
    %v657 = vld [vmem:[#allocation8 + $0x60] sm:$0xff]
    %v658 = vld [vmem:[#allocation8 + $0x68] sm:$0xff]
    %v659 = vld [vmem:[#allocation8 + $0x70] sm:$0xff]
    %v660 = vld [vmem:[#allocation8 + $0x78] sm:$0xff]
    %v661 = vld [vmem:[#allocation8 + $0x80] sm:$0xff]
    %v662 = vld [vmem:[#allocation8 + $0x88] sm:$0xff]
    %v663 = vld [vmem:[#allocation8 + $0x90] sm:$0xff]
    %v664 = vld [vmem:[#allocation8 + $0x98] sm:$0xff]
    %v665 = vld [vmem:[#allocation8 + $0xa0] sm:$0xff]
    %v666 = vld [vmem:[#allocation8 + $0xa8] sm:$0xff]
    %v667 = vld [vmem:[#allocation8 + $0xb0] sm:$0xff]
    %v668 = vld [vmem:[#allocation8 + $0xb8] sm:$0xff]
    %v669 = vld [vmem:[#allocation8 + $0xc0] sm:$0xff]
    %v670 = vld [vmem:[#allocation8 + $0xc8] sm:$0xff]
    %v671 = vld [vmem:[#allocation8 + $0xd0] sm:$0xff]
    %v672 = vld [vmem:[#allocation8 + $0xd8] sm:$0xff]
    %v673 = vld [vmem:[#allocation8 + $0xe0] sm:$0xff]
    %v674 = vld [vmem:[#allocation8 + $0xe8] sm:$0xff]
    %v675 = vld [vmem:[#allocation8 + $0xf0] sm:$0xff]
    %v676 = vld [vmem:[#allocation8 + $0xf8] sm:$0xff]
    %v677 = vld [vmem:[#allocation10] sm:$0xf]
    %v678 = vld [vmem:[#allocation10 + $0x4] sm:$0xf]
    %v679 = vld [vmem:[#allocation10 + $0x8] sm:$0xf]
    %v680 = vld [vmem:[#allocation10 + $0xc] sm:$0xf]
    %v681 = vld [vmem:[#allocation10 + $0x10] sm:$0xf]
    %v682 = vld [vmem:[#allocation10 + $0x14] sm:$0xf]
    %v683 = vld [vmem:[#allocation10 + $0x18] sm:$0xf]
    %v684 = vld [vmem:[#allocation10 + $0x1c] sm:$0xf]
    %v685 = vld [vmem:[#allocation10 + $0x20] sm:$0xf]
    %v686 = vld [vmem:[#allocation10 + $0x24] sm:$0xf]
    %v687 = vld [vmem:[#allocation10 + $0x28] sm:$0xf]
    %v688 = vld [vmem:[#allocation10 + $0x2c] sm:$0xf]
    %v689 = vld [vmem:[#allocation10 + $0x30] sm:$0xf]
    %v690 = vld [vmem:[#allocation10 + $0x34] sm:$0xf]
    %v691 = vld [vmem:[#allocation10 + $0x38] sm:$0xf]
    %v692 = vld [vmem:[#allocation10 + $0x3c] sm:$0xf]
    %v693 = vld [vmem:[#allocation11] sm:$0xf]
    %v694 = vld [vmem:[#allocation11 + $0x4] sm:$0xf]
    %v695 = vld [vmem:[#allocation11 + $0x8] sm:$0xf]
    %v696 = vld [vmem:[#allocation11 + $0xc] sm:$0xf]
    %v697 = vld [vmem:[#allocation11 + $0x10] sm:$0xf]
    %v698 = vld [vmem:[#allocation11 + $0x14] sm:$0xf]
    %v699 = vld [vmem:[#allocation11 + $0x18] sm:$0xf]
    %v700 = vld [vmem:[#allocation11 + $0x1c] sm:$0xf]
    %v701 = vld [vmem:[#allocation11 + $0x20] sm:$0xf]
    %v702 = vld [vmem:[#allocation11 + $0x24] sm:$0xf]
    %v703 = vld [vmem:[#allocation11 + $0x28] sm:$0xf]
    %v704 = vld [vmem:[#allocation11 + $0x2c] sm:$0xf]
    %v705 = vld [vmem:[#allocation11 + $0x30] sm:$0xf]
    %v706 = vld [vmem:[#allocation11 + $0x34] sm:$0xf]
    %v707 = vld [vmem:[#allocation11 + $0x38] sm:$0xf]
    %v708 = vld [vmem:[#allocation11 + $0x3c] sm:$0xf]
    %v741 = vunpack.c.l.b16 %v645
    %v742 = vunpack.c.h.b16 %v645
    %v743 = vunpack.c.l.b16 %v646
    %v744 = vunpack.c.h.b16 %v646
    %v745 = vunpack.c.l.b16 %v647
    %v746 = vunpack.c.h.b16 %v647
    %v747 = vunpack.c.l.b16 %v648
    %v748 = vunpack.c.h.b16 %v648
    %v749 = vunpack.c.l.b16 %v649
    %v750 = vunpack.c.h.b16 %v649
    %v751 = vunpack.c.l.b16 %v650
    %v752 = vunpack.c.h.b16 %v650
    %v753 = vunpack.c.l.b16 %v651
    %v754 = vunpack.c.h.b16 %v651
    %v755 = vunpack.c.l.b16 %v652
    %v756 = vunpack.c.h.b16 %v652
    %v757 = vunpack.c.l.b16 %v653
    %v758 = vunpack.c.h.b16 %v653
    %v759 = vunpack.c.l.b16 %v654
    %v760 = vunpack.c.h.b16 %v654
    %v761 = vunpack.c.l.b16 %v655
    %v762 = vunpack.c.h.b16 %v655
    %v763 = vunpack.c.l.b16 %v656
    %v764 = vunpack.c.h.b16 %v656
    %v765 = vunpack.c.l.b16 %v657
    %v766 = vunpack.c.h.b16 %v657
    %v767 = vunpack.c.l.b16 %v658
    %v768 = vunpack.c.h.b16 %v658
    %v769 = vunpack.c.l.b16 %v659
    %v770 = vunpack.c.h.b16 %v659
    %v771 = vunpack.c.l.b16 %v660
    %v772 = vunpack.c.h.b16 %v660
    %v773 = vunpack.c.l.b16 %v661
    %v774 = vunpack.c.h.b16 %v661
    %v775 = vunpack.c.l.b16 %v662
    %v776 = vunpack.c.h.b16 %v662
    %v777 = vunpack.c.l.b16 %v663
    %v778 = vunpack.c.h.b16 %v663
    %v779 = vunpack.c.l.b16 %v664
    %v780 = vunpack.c.h.b16 %v664
    %v781 = vunpack.c.l.b16 %v665
    %v782 = vunpack.c.h.b16 %v665
    %v783 = vunpack.c.l.b16 %v666
    %v784 = vunpack.c.h.b16 %v666
    %v785 = vunpack.c.l.b16 %v667
    %v786 = vunpack.c.h.b16 %v667
    %v787 = vunpack.c.l.b16 %v668
    %v788 = vunpack.c.h.b16 %v668
    %v789 = vunpack.c.l.b16 %v669
    %v790 = vunpack.c.h.b16 %v669
    %v791 = vunpack.c.l.b16 %v670
    %v792 = vunpack.c.h.b16 %v670
    %v793 = vunpack.c.l.b16 %v671
    %v794 = vunpack.c.h.b16 %v671
    %v795 = vunpack.c.l.b16 %v672
    %v796 = vunpack.c.h.b16 %v672
    %v797 = vunpack.c.l.b16 %v673
    %v798 = vunpack.c.h.b16 %v673
    %v799 = vunpack.c.l.b16 %v674
    %v800 = vunpack.c.h.b16 %v674
    %v801 = vunpack.c.l.b16 %v675
    %v802 = vunpack.c.h.b16 %v675
    %v803 = vunpack.c.l.b16 %v676
    %v804 = vunpack.c.h.b16 %v676
    %v805 = vpack.c.b16 %v743, %v741
    %v806 = vpack.c.b16 %v744, %v742
    %v807 = vpack.c.b16 %v747, %v745
    %v808 = vpack.c.b16 %v748, %v746
    %v809 = vpack.c.b16 %v751, %v749
    %v810 = vpack.c.b16 %v752, %v750
    %v811 = vpack.c.b16 %v755, %v753
    %v812 = vpack.c.b16 %v756, %v754
    %v813 = vpack.c.b16 %v759, %v757
    %v814 = vpack.c.b16 %v760, %v758
    %v815 = vpack.c.b16 %v763, %v761
    %v816 = vpack.c.b16 %v764, %v762
    %v817 = vpack.c.b16 %v767, %v765
    %v818 = vpack.c.b16 %v768, %v766
    %v819 = vpack.c.b16 %v771, %v769
    %v820 = vpack.c.b16 %v772, %v770
    %v821 = vpack.c.b16 %v775, %v773
    %v822 = vpack.c.b16 %v776, %v774
    %v823 = vpack.c.b16 %v779, %v777
    %v824 = vpack.c.b16 %v780, %v778
    %v825 = vpack.c.b16 %v783, %v781
    %v826 = vpack.c.b16 %v784, %v782
    %v827 = vpack.c.b16 %v787, %v785
    %v828 = vpack.c.b16 %v788, %v786
    %v829 = vpack.c.b16 %v791, %v789
    %v830 = vpack.c.b16 %v792, %v790
    %v831 = vpack.c.b16 %v795, %v793
    %v832 = vpack.c.b16 %v796, %v794
    %v833 = vpack.c.b16 %v799, %v797
    %v834 = vpack.c.b16 %v800, %v798
    %v835 = vpack.c.b16 %v803, %v801
    %v836 = vpack.c.b16 %v804, %v802
    %869 = vmatprep.subr.bf16.mxu0 %v820
    %870 = vmatpush1.bf16.msra.mxu0 %v819
    %871 = vmatprep.subr.bf16.mxu0 %v818
    %872 = vmatpush1.bf16.msra.mxu0 %v817
    %873 = vmatprep.subr.bf16.mxu0 %v816
    %874 = vmatpush1.bf16.msra.mxu0 %v815
    %875 = vmatprep.subr.bf16.mxu0 %v814
    %876 = vmatpush1.bf16.msra.mxu0 %v813
    %877 = vmatprep.subr.bf16.mxu0 %v812
    %878 = vmatpush1.bf16.msra.mxu0 %v811
    %879 = vmatprep.subr.bf16.mxu0 %v810
    %880 = vmatpush1.bf16.msra.mxu0 %v809
    %881 = vmatprep.subr.bf16.mxu0 %v808
    %882 = vmatpush1.bf16.msra.mxu0 %v807
    %883 = vmatprep.subr.bf16.mxu0 %v806
    %884 = vmatpush1.bf16.msra.mxu0 %v805
    %885 = vmatprep.subr.bf16.mxu0 %v836
    %886 = vmatpush2.bf16.msra.mxu0 %v835
    %887 = vmatprep.subr.bf16.mxu0 %v834
    %888 = vmatpush2.bf16.msra.mxu0 %v833
    %889 = vmatprep.subr.bf16.mxu0 %v832
    %890 = vmatpush2.bf16.msra.mxu0 %v831
    %891 = vmatprep.subr.bf16.mxu0 %v830
    %892 = vmatpush2.bf16.msra.mxu0 %v829
    %893 = vmatprep.subr.bf16.mxu0 %v828
    %894 = vmatpush2.bf16.msra.mxu0 %v827
    %895 = vmatprep.subr.bf16.mxu0 %v826
    %896 = vmatpush2.bf16.msra.mxu0 %v825
    %897 = vmatprep.subr.bf16.mxu0 %v824
    %898 = vmatpush2.bf16.msra.mxu0 %v823
    %899 = vmatprep.subr.bf16.mxu0 %v822
    %900 = vmatpush2.bf16.msra.mxu0 %v821
    %901 = vmatprep.mubr.bf16.mxu0 0
    %902 = vmatmul.mubr.bf16.gmra.mxu0 0
    %v903 = vpop.f32.mrf.mxu0
    %v904 = vadd.f32 0.0, %v903
    %v905 = vpop.f32.mrf.mxu0
    %v906 = vadd.f32 0.0, %v905
    %v907 = vpop.f32.mrf.mxu0
    %v908 = vpop.f32.mrf.mxu0
    %909 = vdwg.mxu0
    %v910 = vadd.f32 %v516, %v904
    %v911 = vadd.f32 %v518, %v906
    %v912 = vpack.c.bf16 %v910, %v910
    %v913 = vpack.c.bf16 %v911, %v911
    %v914 = vtanh.bf16.pop %v912
    %v915 = vtanh.bf16.pop %v913
    %v916 = vsub.bf16 %v915, %v914
    %v917 = vld [vmem:[%s7] sm:$0x1]
    %v918 = vlaneseq
    %v919 = vshrl.u32 %v918, 7
    %v920 = vsub.s32 0, %v919
    %v921 = vrot.slane %v917, %v920
    %v938 = vunpack.c.l.b16 %v677
    %v939 = vunpack.c.l.b16 %v678
    %v940 = vunpack.c.l.b16 %v679
    %v941 = vunpack.c.l.b16 %v680
    %v942 = vunpack.c.l.b16 %v681
    %v943 = vunpack.c.l.b16 %v682
    %v944 = vunpack.c.l.b16 %v683
    %v945 = vunpack.c.l.b16 %v684
    %v946 = vunpack.c.l.b16 %v685
    %v947 = vunpack.c.l.b16 %v686
    %v948 = vunpack.c.l.b16 %v687
    %v949 = vunpack.c.l.b16 %v688
    %v950 = vunpack.c.l.b16 %v689
    %v951 = vunpack.c.l.b16 %v690
    %v952 = vunpack.c.l.b16 %v691
    %v953 = vunpack.c.l.b16 %v692
    %v954 = vpack.c.b16 %v939, %v938
    %v955 = vpack.c.b16 %v941, %v940
    %v956 = vpack.c.b16 %v943, %v942
    %v957 = vpack.c.b16 %v945, %v944
    %v958 = vpack.c.b16 %v947, %v946
    %v959 = vpack.c.b16 %v949, %v948
    %v960 = vpack.c.b16 %v951, %v950
    %v961 = vpack.c.b16 %v953, %v952
    %970 = vmatprep.subr.bf16.mxu0 0
    %971 = vmatpush1.bf16.msra.mxu0 %v961
    %972 = vmatprep.subr.bf16.mxu0 0
    %973 = vmatpush1.bf16.msra.mxu0 %v960
    %974 = vmatprep.subr.bf16.mxu0 0
    %975 = vmatpush1.bf16.msra.mxu0 %v959
    %976 = vmatprep.subr.bf16.mxu0 0
    %977 = vmatpush1.bf16.msra.mxu0 %v958
    %978 = vmatprep.subr.bf16.mxu0 0
    %979 = vmatpush1.bf16.msra.mxu0 %v957
    %980 = vmatprep.subr.bf16.mxu0 0
    %981 = vmatpush1.bf16.msra.mxu0 %v956
    %982 = vmatprep.subr.bf16.mxu0 0
    %983 = vmatpush1.bf16.msra.mxu0 %v955
    %984 = vmatprep.subr.bf16.mxu0 0
    %985 = vmatpush1.bf16.msra.mxu0 %v954
    %986 = vmatprep.subr.bf16.mxu0 0
    %987 = vmatpush2.bf16.msra.mxu0 0
    %988 = vmatprep.subr.bf16.mxu0 0
    %989 = vmatpush2.bf16.msra.mxu0 0
    %990 = vmatprep.subr.bf16.mxu0 0
    %991 = vmatpush2.bf16.msra.mxu0 0
    %992 = vmatprep.subr.bf16.mxu0 0
    %993 = vmatpush2.bf16.msra.mxu0 0
    %994 = vmatprep.subr.bf16.mxu0 0
    %995 = vmatpush2.bf16.msra.mxu0 0
    %996 = vmatprep.subr.bf16.mxu0 0
    %997 = vmatpush2.bf16.msra.mxu0 0
    %998 = vmatprep.subr.bf16.mxu0 0
    %999 = vmatpush2.bf16.msra.mxu0 0
    %1000 = vmatprep.subr.bf16.mxu0 0
    %1001 = vmatpush2.bf16.msra.mxu0 0
    %1002 = vmatprep.mubr.bf16.mxu0 0
    %1003 = vmatmul.mubr.bf16.gmra.mxu0 %v916
    %v1004 = vpop.f32.mrf.mxu0
    %v1005 = vadd.f32 %v921, %v1004
    %v1006 = vpop.f32.mrf.mxu0
    %v1007 = vpop.f32.mrf.mxu0
    %v1008 = vpop.f32.mrf.mxu0
    %1009 = vdwg.mxu0
    %v1026 = vunpack.c.l.b16 %v693
    %v1027 = vunpack.c.l.b16 %v694
    %v1028 = vunpack.c.l.b16 %v695
    %v1029 = vunpack.c.l.b16 %v696
    %v1030 = vunpack.c.l.b16 %v697
    %v1031 = vunpack.c.l.b16 %v698
    %v1032 = vunpack.c.l.b16 %v699
    %v1033 = vunpack.c.l.b16 %v700
    %v1034 = vunpack.c.l.b16 %v701
    %v1035 = vunpack.c.l.b16 %v702
    %v1036 = vunpack.c.l.b16 %v703
    %v1037 = vunpack.c.l.b16 %v704
    %v1038 = vunpack.c.l.b16 %v705
    %v1039 = vunpack.c.l.b16 %v706
    %v1040 = vunpack.c.l.b16 %v707
    %v1041 = vunpack.c.l.b16 %v708
    %v1042 = vpack.c.b16 %v1027, %v1026
    %v1043 = vpack.c.b16 %v1029, %v1028
    %v1044 = vpack.c.b16 %v1031, %v1030
    %v1045 = vpack.c.b16 %v1033, %v1032
    %v1046 = vpack.c.b16 %v1035, %v1034
    %v1047 = vpack.c.b16 %v1037, %v1036
    %v1048 = vpack.c.b16 %v1039, %v1038
    %v1049 = vpack.c.b16 %v1041, %v1040
    %1058 = vmatprep.subr.bf16.mxu0 0
    %1059 = vmatpush1.bf16.msra.mxu0 %v1049
    %1060 = vmatprep.subr.bf16.mxu0 0
    %1061 = vmatpush1.bf16.msra.mxu0 %v1048
    %1062 = vmatprep.subr.bf16.mxu0 0
    %1063 = vmatpush1.bf16.msra.mxu0 %v1047
    %1064 = vmatprep.subr.bf16.mxu0 0
    %1065 = vmatpush1.bf16.msra.mxu0 %v1046
    %1066 = vmatprep.subr.bf16.mxu0 0
    %1067 = vmatpush1.bf16.msra.mxu0 %v1045
    %1068 = vmatprep.subr.bf16.mxu0 0
    %1069 = vmatpush1.bf16.msra.mxu0 %v1044
    %1070 = vmatprep.subr.bf16.mxu0 0
    %1071 = vmatpush1.bf16.msra.mxu0 %v1043
    %1072 = vmatprep.subr.bf16.mxu0 0
    %1073 = vmatpush1.bf16.msra.mxu0 %v1042
    %1074 = vmatprep.subr.bf16.mxu0 0
    %1075 = vmatpush2.bf16.msra.mxu0 0
    %1076 = vmatprep.subr.bf16.mxu0 0
    %1077 = vmatpush2.bf16.msra.mxu0 0
    %1078 = vmatprep.subr.bf16.mxu0 0
    %1079 = vmatpush2.bf16.msra.mxu0 0
    %1080 = vmatprep.subr.bf16.mxu0 0
    %1081 = vmatpush2.bf16.msra.mxu0 0
    %1082 = vmatprep.subr.bf16.mxu0 0
    %1083 = vmatpush2.bf16.msra.mxu0 0
    %1084 = vmatprep.subr.bf16.mxu0 0
    %1085 = vmatpush2.bf16.msra.mxu0 0
    %1086 = vmatprep.subr.bf16.mxu0 0
    %1087 = vmatpush2.bf16.msra.mxu0 0
    %1088 = vmatprep.subr.bf16.mxu0 0
    %1089 = vmatpush2.bf16.msra.mxu0 0
    %1090 = vmatprep.mubr.bf16.mxu0 0
    %1091 = vmatmul.mubr.bf16.gmra.mxu0 0
    %v1092 = vpop.f32.mrf.mxu0
    %v1093 = vadd.f32 0.0, %v1092
    %v1094 = vpop.f32.mrf.mxu0
    %v1095 = vpop.f32.mrf.mxu0
    %v1096 = vpop.f32.mrf.mxu0
    %1097 = vdwg.mxu0
    %v1098 = vadd.f32 %v1005, %v1093
    %v1099 = vpack.c.bf16 %v1098, %v1098
    %v1100 = vtanh.bf16.pop %v1099
    %1101 = vmatprep.subr.bf16.mxu0 %v820
    %1102 = vmatpush1.bf16.msra.mxu0 %v819
    %1103 = vmatprep.subr.bf16.mxu0 %v818
    %1104 = vmatpush1.bf16.msra.mxu0 %v817
    %1105 = vmatprep.subr.bf16.mxu0 %v816
    %1106 = vmatpush1.bf16.msra.mxu0 %v815
    %1107 = vmatprep.subr.bf16.mxu0 %v814
    %1108 = vmatpush1.bf16.msra.mxu0 %v813
    %1109 = vmatprep.subr.bf16.mxu0 %v812
    %1110 = vmatpush1.bf16.msra.mxu0 %v811
    %1111 = vmatprep.subr.bf16.mxu0 %v810
    %1112 = vmatpush1.bf16.msra.mxu0 %v809
    %1113 = vmatprep.subr.bf16.mxu0 %v808
    %1114 = vmatpush1.bf16.msra.mxu0 %v807
    %1115 = vmatprep.subr.bf16.mxu0 %v806
    %1116 = vmatpush1.bf16.msra.mxu0 %v805
    %1117 = vmatprep.subr.bf16.mxu0 %v836
    %1118 = vmatpush2.bf16.msra.mxu0 %v835
    %1119 = vmatprep.subr.bf16.mxu0 %v834
    %1120 = vmatpush2.bf16.msra.mxu0 %v833
    %1121 = vmatprep.subr.bf16.mxu0 %v832
    %1122 = vmatpush2.bf16.msra.mxu0 %v831
    %1123 = vmatprep.subr.bf16.mxu0 %v830
    %1124 = vmatpush2.bf16.msra.mxu0 %v829
    %1125 = vmatprep.subr.bf16.mxu0 %v828
    %1126 = vmatpush2.bf16.msra.mxu0 %v827
    %1127 = vmatprep.subr.bf16.mxu0 %v826
    %1128 = vmatpush2.bf16.msra.mxu0 %v825
    %1129 = vmatprep.subr.bf16.mxu0 %v824
    %1130 = vmatpush2.bf16.msra.mxu0 %v823
    %1131 = vmatprep.subr.bf16.mxu0 %v822
    %1132 = vmatpush2.bf16.msra.mxu0 %v821
    %1133 = vmatprep.mubr.bf16.mxu0 %v915
    %1134 = vmatmul.mubr.bf16.gmra.mxu0 %v914
    %v1135 = vpop.f32.mrf.mxu0
    %v1136 = vadd.f32 0.0, %v1135
    %v1137 = vpop.f32.mrf.mxu0
    %v1138 = vadd.f32 0.0, %v1137
    %v1139 = vpop.f32.mrf.mxu0
    %v1140 = vpop.f32.mrf.mxu0
    %1141 = vdwg.mxu0
    %v1142 = vadd.f32 %v557, %v1136
    %v1143 = vadd.f32 %v559, %v1138
    %v1144 = vpack.c.bf16 %v1142, %v1142
    %v1145 = vpack.c.bf16 %v1143, %v1143
    %v1146 = vtanh.bf16.pop %v1144
    %v1147 = vtanh.bf16.pop %v1145
    %v1148 = vsub.bf16 %v1147, %v1146
    %v1149 = vld [vmem:[%s7 + $0x1] sm:$0x1]
    %v1150 = vlaneseq
    %v1151 = vshrl.u32 %v1150, 7
    %v1152 = vsub.s32 0, %v1151
    %v1153 = vrot.slane %v1149, %v1152
    %1154 = vmatprep.subr.bf16.mxu0 0
    %1155 = vmatpush1.bf16.msra.mxu0 %v961
    %1156 = vmatprep.subr.bf16.mxu0 0
    %1157 = vmatpush1.bf16.msra.mxu0 %v960
    %1158 = vmatprep.subr.bf16.mxu0 0
    %1159 = vmatpush1.bf16.msra.mxu0 %v959
    %1160 = vmatprep.subr.bf16.mxu0 0
    %1161 = vmatpush1.bf16.msra.mxu0 %v958
    %1162 = vmatprep.subr.bf16.mxu0 0
    %1163 = vmatpush1.bf16.msra.mxu0 %v957
    %1164 = vmatprep.subr.bf16.mxu0 0
    %1165 = vmatpush1.bf16.msra.mxu0 %v956
    %1166 = vmatprep.subr.bf16.mxu0 0
    %1167 = vmatpush1.bf16.msra.mxu0 %v955
    %1168 = vmatprep.subr.bf16.mxu0 0
    %1169 = vmatpush1.bf16.msra.mxu0 %v954
    %1170 = vmatprep.subr.bf16.mxu0 0
    %1171 = vmatpush2.bf16.msra.mxu0 0
    %1172 = vmatprep.subr.bf16.mxu0 0
    %1173 = vmatpush2.bf16.msra.mxu0 0
    %1174 = vmatprep.subr.bf16.mxu0 0
    %1175 = vmatpush2.bf16.msra.mxu0 0
    %1176 = vmatprep.subr.bf16.mxu0 0
    %1177 = vmatpush2.bf16.msra.mxu0 0
    %1178 = vmatprep.subr.bf16.mxu0 0
    %1179 = vmatpush2.bf16.msra.mxu0 0
    %1180 = vmatprep.subr.bf16.mxu0 0
    %1181 = vmatpush2.bf16.msra.mxu0 0
    %1182 = vmatprep.subr.bf16.mxu0 0
    %1183 = vmatpush2.bf16.msra.mxu0 0
    %1184 = vmatprep.subr.bf16.mxu0 0
    %1185 = vmatpush2.bf16.msra.mxu0 0
    %1186 = vmatprep.mubr.bf16.mxu0 0
    %1187 = vmatmul.mubr.bf16.gmra.mxu0 %v1148
    %v1188 = vpop.f32.mrf.mxu0
    %v1189 = vadd.f32 %v1153, %v1188
    %v1190 = vpop.f32.mrf.mxu0
    %v1191 = vpop.f32.mrf.mxu0
    %v1192 = vpop.f32.mrf.mxu0
    %1193 = vdwg.mxu0
    %1194 = vmatprep.subr.bf16.mxu0 0
    %1195 = vmatpush1.bf16.msra.mxu0 %v1049
    %1196 = vmatprep.subr.bf16.mxu0 0
    %1197 = vmatpush1.bf16.msra.mxu0 %v1048
    %1198 = vmatprep.subr.bf16.mxu0 0
    %1199 = vmatpush1.bf16.msra.mxu0 %v1047
    %1200 = vmatprep.subr.bf16.mxu0 0
    %1201 = vmatpush1.bf16.msra.mxu0 %v1046
    %1202 = vmatprep.subr.bf16.mxu0 0
    %1203 = vmatpush1.bf16.msra.mxu0 %v1045
    %1204 = vmatprep.subr.bf16.mxu0 0
    %1205 = vmatpush1.bf16.msra.mxu0 %v1044
    %1206 = vmatprep.subr.bf16.mxu0 0
    %1207 = vmatpush1.bf16.msra.mxu0 %v1043
    %1208 = vmatprep.subr.bf16.mxu0 0
    %1209 = vmatpush1.bf16.msra.mxu0 %v1042
    %1210 = vmatprep.subr.bf16.mxu0 0
    %1211 = vmatpush2.bf16.msra.mxu0 0
    %1212 = vmatprep.subr.bf16.mxu0 0
    %1213 = vmatpush2.bf16.msra.mxu0 0
    %1214 = vmatprep.subr.bf16.mxu0 0
    %1215 = vmatpush2.bf16.msra.mxu0 0
    %1216 = vmatprep.subr.bf16.mxu0 0
    %1217 = vmatpush2.bf16.msra.mxu0 0
    %1218 = vmatprep.subr.bf16.mxu0 0
    %1219 = vmatpush2.bf16.msra.mxu0 0
    %1220 = vmatprep.subr.bf16.mxu0 0
    %1221 = vmatpush2.bf16.msra.mxu0 0
    %1222 = vmatprep.subr.bf16.mxu0 0
    %1223 = vmatpush2.bf16.msra.mxu0 0
    %1224 = vmatprep.subr.bf16.mxu0 0
    %1225 = vmatpush2.bf16.msra.mxu0 0
    %1226 = vmatprep.mubr.bf16.mxu0 0
    %1227 = vmatmul.mubr.bf16.gmra.mxu0 %v1100
    %v1228 = vpop.f32.mrf.mxu0
    %v1229 = vadd.f32 0.0, %v1228
    %v1230 = vpop.f32.mrf.mxu0
    %v1231 = vpop.f32.mrf.mxu0
    %v1232 = vpop.f32.mrf.mxu0
    %1233 = vdwg.mxu0
    %v1234 = vadd.f32 %v1189, %v1229
    %v1235 = vpack.c.bf16 %v1234, %v1234
    %v1236 = vtanh.bf16.pop %v1235
    %1237 = vmatprep.subr.bf16.mxu0 %v820
    %1238 = vmatpush1.bf16.msra.mxu0 %v819
    %1239 = vmatprep.subr.bf16.mxu0 %v818
    %1240 = vmatpush1.bf16.msra.mxu0 %v817
    %1241 = vmatprep.subr.bf16.mxu0 %v816
    %1242 = vmatpush1.bf16.msra.mxu0 %v815
    %1243 = vmatprep.subr.bf16.mxu0 %v814
    %1244 = vmatpush1.bf16.msra.mxu0 %v813
    %1245 = vmatprep.subr.bf16.mxu0 %v812
    %1246 = vmatpush1.bf16.msra.mxu0 %v811
    %1247 = vmatprep.subr.bf16.mxu0 %v810
    %1248 = vmatpush1.bf16.msra.mxu0 %v809
    %1249 = vmatprep.subr.bf16.mxu0 %v808
    %1250 = vmatpush1.bf16.msra.mxu0 %v807
    %1251 = vmatprep.subr.bf16.mxu0 %v806
    %1252 = vmatpush1.bf16.msra.mxu0 %v805
    %1253 = vmatprep.subr.bf16.mxu0 %v836
    %1254 = vmatpush2.bf16.msra.mxu0 %v835
    %1255 = vmatprep.subr.bf16.mxu0 %v834
    %1256 = vmatpush2.bf16.msra.mxu0 %v833
    %1257 = vmatprep.subr.bf16.mxu0 %v832
    %1258 = vmatpush2.bf16.msra.mxu0 %v831
    %1259 = vmatprep.subr.bf16.mxu0 %v830
    %1260 = vmatpush2.bf16.msra.mxu0 %v829
    %1261 = vmatprep.subr.bf16.mxu0 %v828
    %1262 = vmatpush2.bf16.msra.mxu0 %v827
    %1263 = vmatprep.subr.bf16.mxu0 %v826
    %1264 = vmatpush2.bf16.msra.mxu0 %v825
    %1265 = vmatprep.subr.bf16.mxu0 %v824
    %1266 = vmatpush2.bf16.msra.mxu0 %v823
    %1267 = vmatprep.subr.bf16.mxu0 %v822
    %1268 = vmatpush2.bf16.msra.mxu0 %v821
    %1269 = vmatprep.mubr.bf16.mxu0 %v1147
    %1270 = vmatmul.mubr.bf16.gmra.mxu0 %v1146
    %v1271 = vpop.f32.mrf.mxu0
    %v1272 = vadd.f32 0.0, %v1271
    %v1273 = vpop.f32.mrf.mxu0
    %v1274 = vadd.f32 0.0, %v1273
    %v1275 = vpop.f32.mrf.mxu0
    %v1276 = vpop.f32.mrf.mxu0
    %1277 = vdwg.mxu0
    %v1278 = vadd.f32 %v598, %v1272
    %v1279 = vadd.f32 %v600, %v1274
    %v1280 = vpack.c.bf16 %v1278, %v1278
    %v1281 = vpack.c.bf16 %v1279, %v1279
    %v1282 = vtanh.bf16.pop %v1280
    %v1283 = vtanh.bf16.pop %v1281
    %v1284 = vsub.bf16 %v1283, %v1282
    %v1285 = vld [vmem:[%s7 + $0x2] sm:$0x1]
    %v1286 = vlaneseq
    %v1287 = vshrl.u32 %v1286, 7
    %v1288 = vsub.s32 0, %v1287
    %v1289 = vrot.slane %v1285, %v1288
    %1290 = vmatprep.subr.bf16.mxu0 0
    %1291 = vmatpush1.bf16.msra.mxu0 %v961
    %1292 = vmatprep.subr.bf16.mxu0 0
    %1293 = vmatpush1.bf16.msra.mxu0 %v960
    %1294 = vmatprep.subr.bf16.mxu0 0
    %1295 = vmatpush1.bf16.msra.mxu0 %v959
    %1296 = vmatprep.subr.bf16.mxu0 0
    %1297 = vmatpush1.bf16.msra.mxu0 %v958
    %1298 = vmatprep.subr.bf16.mxu0 0
    %1299 = vmatpush1.bf16.msra.mxu0 %v957
    %1300 = vmatprep.subr.bf16.mxu0 0
    %1301 = vmatpush1.bf16.msra.mxu0 %v956
    %1302 = vmatprep.subr.bf16.mxu0 0
    %1303 = vmatpush1.bf16.msra.mxu0 %v955
    %1304 = vmatprep.subr.bf16.mxu0 0
    %1305 = vmatpush1.bf16.msra.mxu0 %v954
    %1306 = vmatprep.subr.bf16.mxu0 0
    %1307 = vmatpush2.bf16.msra.mxu0 0
    %1308 = vmatprep.subr.bf16.mxu0 0
    %1309 = vmatpush2.bf16.msra.mxu0 0
    %1310 = vmatprep.subr.bf16.mxu0 0
    %1311 = vmatpush2.bf16.msra.mxu0 0
    %1312 = vmatprep.subr.bf16.mxu0 0
    %1313 = vmatpush2.bf16.msra.mxu0 0
    %1314 = vmatprep.subr.bf16.mxu0 0
    %1315 = vmatpush2.bf16.msra.mxu0 0
    %1316 = vmatprep.subr.bf16.mxu0 0
    %1317 = vmatpush2.bf16.msra.mxu0 0
    %1318 = vmatprep.subr.bf16.mxu0 0
    %1319 = vmatpush2.bf16.msra.mxu0 0
    %1320 = vmatprep.subr.bf16.mxu0 0
    %1321 = vmatpush2.bf16.msra.mxu0 0
    %1322 = vmatprep.mubr.bf16.mxu0 0
    %1323 = vmatmul.mubr.bf16.gmra.mxu0 %v1284
    %v1324 = vpop.f32.mrf.mxu0
    %v1325 = vadd.f32 %v1289, %v1324
    %v1326 = vpop.f32.mrf.mxu0
    %v1327 = vpop.f32.mrf.mxu0
    %v1328 = vpop.f32.mrf.mxu0
    %1329 = vdwg.mxu0
    %1330 = vmatprep.subr.bf16.mxu0 0
    %1331 = vmatpush1.bf16.msra.mxu0 %v1049
    %1332 = vmatprep.subr.bf16.mxu0 0
    %1333 = vmatpush1.bf16.msra.mxu0 %v1048
    %1334 = vmatprep.subr.bf16.mxu0 0
    %1335 = vmatpush1.bf16.msra.mxu0 %v1047
    %1336 = vmatprep.subr.bf16.mxu0 0
    %1337 = vmatpush1.bf16.msra.mxu0 %v1046
    %1338 = vmatprep.subr.bf16.mxu0 0
    %1339 = vmatpush1.bf16.msra.mxu0 %v1045
    %1340 = vmatprep.subr.bf16.mxu0 0
    %1341 = vmatpush1.bf16.msra.mxu0 %v1044
    %1342 = vmatprep.subr.bf16.mxu0 0
    %1343 = vmatpush1.bf16.msra.mxu0 %v1043
    %1344 = vmatprep.subr.bf16.mxu0 0
    %1345 = vmatpush1.bf16.msra.mxu0 %v1042
    %1346 = vmatprep.subr.bf16.mxu0 0
    %1347 = vmatpush2.bf16.msra.mxu0 0
    %1348 = vmatprep.subr.bf16.mxu0 0
    %1349 = vmatpush2.bf16.msra.mxu0 0
    %1350 = vmatprep.subr.bf16.mxu0 0
    %1351 = vmatpush2.bf16.msra.mxu0 0
    %1352 = vmatprep.subr.bf16.mxu0 0
    %1353 = vmatpush2.bf16.msra.mxu0 0
    %1354 = vmatprep.subr.bf16.mxu0 0
    %1355 = vmatpush2.bf16.msra.mxu0 0
    %1356 = vmatprep.subr.bf16.mxu0 0
    %1357 = vmatpush2.bf16.msra.mxu0 0
    %1358 = vmatprep.subr.bf16.mxu0 0
    %1359 = vmatpush2.bf16.msra.mxu0 0
    %1360 = vmatprep.subr.bf16.mxu0 0
    %1361 = vmatpush2.bf16.msra.mxu0 0
    %1362 = vmatprep.mubr.bf16.mxu0 0
    %1363 = vmatmul.mubr.bf16.gmra.mxu0 %v1236
    %v1364 = vpop.f32.mrf.mxu0
    %v1365 = vadd.f32 0.0, %v1364
    %v1366 = vpop.f32.mrf.mxu0
    %v1367 = vpop.f32.mrf.mxu0
    %v1368 = vpop.f32.mrf.mxu0
    %1369 = vdwg.mxu0
    %v1370 = vadd.f32 %v1325, %v1365
    %v1371 = vpack.c.bf16 %v1370, %v1370
    %v1372 = vtanh.bf16.pop %v1371
    %1373 = vmatprep.subr.bf16.mxu0 %v820
    %1374 = vmatpush1.bf16.msra.mxu0 %v819
    %1375 = vmatprep.subr.bf16.mxu0 %v818
    %1376 = vmatpush1.bf16.msra.mxu0 %v817
    %1377 = vmatprep.subr.bf16.mxu0 %v816
    %1378 = vmatpush1.bf16.msra.mxu0 %v815
    %1379 = vmatprep.subr.bf16.mxu0 %v814
    %1380 = vmatpush1.bf16.msra.mxu0 %v813
    %1381 = vmatprep.subr.bf16.mxu0 %v812
    %1382 = vmatpush1.bf16.msra.mxu0 %v811
    %1383 = vmatprep.subr.bf16.mxu0 %v810
    %1384 = vmatpush1.bf16.msra.mxu0 %v809
    %1385 = vmatprep.subr.bf16.mxu0 %v808
    %1386 = vmatpush1.bf16.msra.mxu0 %v807
    %1387 = vmatprep.subr.bf16.mxu0 %v806
    %1388 = vmatpush1.bf16.msra.mxu0 %v805
    %1389 = vmatprep.subr.bf16.mxu0 %v836
    %1390 = vmatpush2.bf16.msra.mxu0 %v835
    %1391 = vmatprep.subr.bf16.mxu0 %v834
    %1392 = vmatpush2.bf16.msra.mxu0 %v833
    %1393 = vmatprep.subr.bf16.mxu0 %v832
    %1394 = vmatpush2.bf16.msra.mxu0 %v831
    %1395 = vmatprep.subr.bf16.mxu0 %v830
    %1396 = vmatpush2.bf16.msra.mxu0 %v829
    %1397 = vmatprep.subr.bf16.mxu0 %v828
    %1398 = vmatpush2.bf16.msra.mxu0 %v827
    %1399 = vmatprep.subr.bf16.mxu0 %v826
    %1400 = vmatpush2.bf16.msra.mxu0 %v825
    %1401 = vmatprep.subr.bf16.mxu0 %v824
    %1402 = vmatpush2.bf16.msra.mxu0 %v823
    %1403 = vmatprep.subr.bf16.mxu0 %v822
    %1404 = vmatpush2.bf16.msra.mxu0 %v821
    %1405 = vmatprep.mubr.bf16.mxu0 %v1283
    %1406 = vmatmul.mubr.bf16.gmra.mxu0 %v1282
    %v1407 = vpop.f32.mrf.mxu0
    %v1408 = vadd.f32 0.0, %v1407
    %v1409 = vpop.f32.mrf.mxu0
    %v1410 = vadd.f32 0.0, %v1409
    %v1411 = vpop.f32.mrf.mxu0
    %v1412 = vpop.f32.mrf.mxu0
    %1413 = vdwg.mxu0
    %v1414 = vadd.f32 %v639, %v1408
    %v1415 = vadd.f32 %v641, %v1410
    %v1416 = vpack.c.bf16 %v1414, %v1414
    %v1417 = vpack.c.bf16 %v1415, %v1415
    %v1418 = vtanh.bf16.pop %v1416
    %v1419 = vtanh.bf16.pop %v1417
    %v1420 = vsub.bf16 %v1419, %v1418
    %v1421 = vld [vmem:[%s7 + $0x3] sm:$0x1]
    %v1422 = vlaneseq
    %v1423 = vshrl.u32 %v1422, 7
    %v1424 = vsub.s32 0, %v1423
    %v1425 = vrot.slane %v1421, %v1424
    %1426 = vmatprep.subr.bf16.mxu0 0
    %1427 = vmatpush1.bf16.msra.mxu0 %v961
    %1428 = vmatprep.subr.bf16.mxu0 0
    %1429 = vmatpush1.bf16.msra.mxu0 %v960
    %1430 = vmatprep.subr.bf16.mxu0 0
    %1431 = vmatpush1.bf16.msra.mxu0 %v959
    %1432 = vmatprep.subr.bf16.mxu0 0
    %1433 = vmatpush1.bf16.msra.mxu0 %v958
    %1434 = vmatprep.subr.bf16.mxu0 0
    %1435 = vmatpush1.bf16.msra.mxu0 %v957
    %1436 = vmatprep.subr.bf16.mxu0 0
    %1437 = vmatpush1.bf16.msra.mxu0 %v956
    %1438 = vmatprep.subr.bf16.mxu0 0
    %1439 = vmatpush1.bf16.msra.mxu0 %v955
    %1440 = vmatprep.subr.bf16.mxu0 0
    %1441 = vmatpush1.bf16.msra.mxu0 %v954
    %1442 = vmatprep.subr.bf16.mxu0 0
    %1443 = vmatpush2.bf16.msra.mxu0 0
    %1444 = vmatprep.subr.bf16.mxu0 0
    %1445 = vmatpush2.bf16.msra.mxu0 0
    %1446 = vmatprep.subr.bf16.mxu0 0
    %1447 = vmatpush2.bf16.msra.mxu0 0
    %1448 = vmatprep.subr.bf16.mxu0 0
    %1449 = vmatpush2.bf16.msra.mxu0 0
    %1450 = vmatprep.subr.bf16.mxu0 0
    %1451 = vmatpush2.bf16.msra.mxu0 0
    %1452 = vmatprep.subr.bf16.mxu0 0
    %1453 = vmatpush2.bf16.msra.mxu0 0
    %1454 = vmatprep.subr.bf16.mxu0 0
    %1455 = vmatpush2.bf16.msra.mxu0 0
    %1456 = vmatprep.subr.bf16.mxu0 0
    %1457 = vmatpush2.bf16.msra.mxu0 0
    %1458 = vmatprep.mubr.bf16.mxu0 0
    %1459 = vmatmul.mubr.bf16.gmra.mxu0 %v1420
    %v1460 = vpop.f32.mrf.mxu0
    %v1461 = vadd.f32 %v1425, %v1460
    %v1462 = vpop.f32.mrf.mxu0
    %v1463 = vpop.f32.mrf.mxu0
    %v1464 = vpop.f32.mrf.mxu0
    %1465 = vdwg.mxu0
    %1466 = vmatprep.subr.bf16.mxu0 0
    %1467 = vmatpush1.bf16.msra.mxu0 %v1049
    %1468 = vmatprep.subr.bf16.mxu0 0
    %1469 = vmatpush1.bf16.msra.mxu0 %v1048
    %1470 = vmatprep.subr.bf16.mxu0 0
    %1471 = vmatpush1.bf16.msra.mxu0 %v1047
    %1472 = vmatprep.subr.bf16.mxu0 0
    %1473 = vmatpush1.bf16.msra.mxu0 %v1046
    %1474 = vmatprep.subr.bf16.mxu0 0
    %1475 = vmatpush1.bf16.msra.mxu0 %v1045
    %1476 = vmatprep.subr.bf16.mxu0 0
    %1477 = vmatpush1.bf16.msra.mxu0 %v1044
    %1478 = vmatprep.subr.bf16.mxu0 0
    %1479 = vmatpush1.bf16.msra.mxu0 %v1043
    %1480 = vmatprep.subr.bf16.mxu0 0
    %1481 = vmatpush1.bf16.msra.mxu0 %v1042
    %1482 = vmatprep.subr.bf16.mxu0 0
    %1483 = vmatpush2.bf16.msra.mxu0 0
    %1484 = vmatprep.subr.bf16.mxu0 0
    %1485 = vmatpush2.bf16.msra.mxu0 0
    %1486 = vmatprep.subr.bf16.mxu0 0
    %1487 = vmatpush2.bf16.msra.mxu0 0
    %1488 = vmatprep.subr.bf16.mxu0 0
    %1489 = vmatpush2.bf16.msra.mxu0 0
    %1490 = vmatprep.subr.bf16.mxu0 0
    %1491 = vmatpush2.bf16.msra.mxu0 0
    %1492 = vmatprep.subr.bf16.mxu0 0
    %1493 = vmatpush2.bf16.msra.mxu0 0
    %1494 = vmatprep.subr.bf16.mxu0 0
    %1495 = vmatpush2.bf16.msra.mxu0 0
    %1496 = vmatprep.subr.bf16.mxu0 0
    %1497 = vmatpush2.bf16.msra.mxu0 0
    %1498 = vmatprep.mubr.bf16.mxu0 0
    %1499 = vmatmul.mubr.bf16.gmra.mxu0 %v1372
    %v1500 = vpop.f32.mrf.mxu0
    %v1501 = vadd.f32 0.0, %v1500
    %v1502 = vpop.f32.mrf.mxu0
    %v1503 = vpop.f32.mrf.mxu0
    %v1504 = vpop.f32.mrf.mxu0
    %1505 = vdwg.mxu0
    %v1506 = vadd.f32 %v1461, %v1501
    %v1507 = vpack.c.bf16 %v1506, %v1506
    %v1508 = vtanh.bf16.pop %v1507
    %v1509 = vld [vmem:[%s8] sm:$0xf]
    %v1510 = vld [vmem:[%s8 + $0x4] sm:$0xf]
    %v1511 = vld [vmem:[%s8 + $0x8] sm:$0xf]
    %v1512 = vld [vmem:[%s8 + $0xc] sm:$0xf]
    %v1513 = vld [vmem:[%s8 + $0x10] sm:$0xf]
    %v1514 = vld [vmem:[%s8 + $0x14] sm:$0xf]
    %v1515 = vld [vmem:[%s8 + $0x18] sm:$0xf]
    %v1516 = vld [vmem:[%s8 + $0x1c] sm:$0xf]
    %v1517 = vld [vmem:[%s8 + $0x20] sm:$0xf]
    %v1518 = vld [vmem:[%s8 + $0x24] sm:$0xf]
    %v1519 = vld [vmem:[%s8 + $0x28] sm:$0xf]
    %v1520 = vld [vmem:[%s8 + $0x2c] sm:$0xf]
    %v1521 = vld [vmem:[%s8 + $0x30] sm:$0xf]
    %v1522 = vld [vmem:[%s8 + $0x34] sm:$0xf]
    %v1523 = vld [vmem:[%s8 + $0x38] sm:$0xf]
    %v1524 = vld [vmem:[%s8 + $0x3c] sm:$0xf]
    %v1525 = vld [vmem:[%s8 + $0x40] sm:$0xf]
    %v1526 = vld [vmem:[%s8 + $0x44] sm:$0xf]
    %v1527 = vld [vmem:[%s8 + $0x48] sm:$0xf]
    %v1528 = vld [vmem:[%s8 + $0x4c] sm:$0xf]
    %v1529 = vld [vmem:[%s8 + $0x50] sm:$0xf]
    %v1530 = vld [vmem:[%s8 + $0x54] sm:$0xf]
    %v1531 = vld [vmem:[%s8 + $0x58] sm:$0xf]
    %v1532 = vld [vmem:[%s8 + $0x5c] sm:$0xf]
    %v1533 = vld [vmem:[%s8 + $0x60] sm:$0xf]
    %v1534 = vld [vmem:[%s8 + $0x64] sm:$0xf]
    %v1535 = vld [vmem:[%s8 + $0x68] sm:$0xf]
    %v1536 = vld [vmem:[%s8 + $0x6c] sm:$0xf]
    %v1537 = vld [vmem:[%s8 + $0x70] sm:$0xf]
    %v1538 = vld [vmem:[%s8 + $0x74] sm:$0xf]
    %v1539 = vld [vmem:[%s8 + $0x78] sm:$0xf]
    %v1540 = vld [vmem:[%s8 + $0x7c] sm:$0xf]
    %v1541 = vld [vmem:[%s8 + $0x80] sm:$0xf]
    %v1542 = vld [vmem:[%s8 + $0x84] sm:$0xf]
    %v1543 = vld [vmem:[%s8 + $0x88] sm:$0xf]
    %v1544 = vld [vmem:[%s8 + $0x8c] sm:$0xf]
    %v1545 = vld [vmem:[%s8 + $0x90] sm:$0xf]
    %v1546 = vld [vmem:[%s8 + $0x94] sm:$0xf]
    %v1547 = vld [vmem:[%s8 + $0x98] sm:$0xf]
    %v1548 = vld [vmem:[%s8 + $0x9c] sm:$0xf]
    %v1549 = vld [vmem:[%s8 + $0xa0] sm:$0xf]
    %v1550 = vld [vmem:[%s8 + $0xa4] sm:$0xf]
    %v1551 = vld [vmem:[%s8 + $0xa8] sm:$0xf]
    %v1552 = vld [vmem:[%s8 + $0xac] sm:$0xf]
    %v1553 = vld [vmem:[%s8 + $0xb0] sm:$0xf]
    %v1554 = vld [vmem:[%s8 + $0xb4] sm:$0xf]
    %v1555 = vld [vmem:[%s8 + $0xb8] sm:$0xf]
    %v1556 = vld [vmem:[%s8 + $0xbc] sm:$0xf]
    %v1557 = vld [vmem:[%s8 + $0xc0] sm:$0xf]
    %v1558 = vld [vmem:[%s8 + $0xc4] sm:$0xf]
    %v1559 = vld [vmem:[%s8 + $0xc8] sm:$0xf]
    %v1560 = vld [vmem:[%s8 + $0xcc] sm:$0xf]
    %v1561 = vld [vmem:[%s8 + $0xd0] sm:$0xf]
    %v1562 = vld [vmem:[%s8 + $0xd4] sm:$0xf]
    %v1563 = vld [vmem:[%s8 + $0xd8] sm:$0xf]
    %v1564 = vld [vmem:[%s8 + $0xdc] sm:$0xf]
    %v1565 = vld [vmem:[%s8 + $0xe0] sm:$0xf]
    %v1566 = vld [vmem:[%s8 + $0xe4] sm:$0xf]
    %v1567 = vld [vmem:[%s8 + $0xe8] sm:$0xf]
    %v1568 = vld [vmem:[%s8 + $0xec] sm:$0xf]
    %v1569 = vld [vmem:[%s8 + $0xf0] sm:$0xf]
    %v1570 = vld [vmem:[%s8 + $0xf4] sm:$0xf]
    %v1571 = vld [vmem:[%s8 + $0xf8] sm:$0xf]
    %v1572 = vld [vmem:[%s8 + $0xfc] sm:$0xf]
    %v1573 = vld [vmem:[%s9] sm:$0x1]
    %v1575 = vlaneseq
    %v1576 = vshrl.u32 %v1575, 7
    %v1577 = vsub.s32 0, %v1576
    %v1578 = vrot.slane %v1573, %v1577
    %v1644 = vunpack.c.l.b16 %v1509
    %v1645 = vunpack.c.l.b16 %v1510
    %v1646 = vunpack.c.l.b16 %v1511
    %v1647 = vunpack.c.l.b16 %v1512
    %v1648 = vunpack.c.l.b16 %v1513
    %v1649 = vunpack.c.l.b16 %v1514
    %v1650 = vunpack.c.l.b16 %v1515
    %v1651 = vunpack.c.l.b16 %v1516
    %v1652 = vunpack.c.l.b16 %v1517
    %v1653 = vunpack.c.l.b16 %v1518
    %v1654 = vunpack.c.l.b16 %v1519
    %v1655 = vunpack.c.l.b16 %v1520
    %v1656 = vunpack.c.l.b16 %v1521
    %v1657 = vunpack.c.l.b16 %v1522
    %v1658 = vunpack.c.l.b16 %v1523
    %v1659 = vunpack.c.l.b16 %v1524
    %v1660 = vunpack.c.l.b16 %v1525
    %v1661 = vunpack.c.l.b16 %v1526
    %v1662 = vunpack.c.l.b16 %v1527
    %v1663 = vunpack.c.l.b16 %v1528
    %v1664 = vunpack.c.l.b16 %v1529
    %v1665 = vunpack.c.l.b16 %v1530
    %v1666 = vunpack.c.l.b16 %v1531
    %v1667 = vunpack.c.l.b16 %v1532
    %v1668 = vunpack.c.l.b16 %v1533
    %v1669 = vunpack.c.l.b16 %v1534
    %v1670 = vunpack.c.l.b16 %v1535
    %v1671 = vunpack.c.l.b16 %v1536
    %v1672 = vunpack.c.l.b16 %v1537
    %v1673 = vunpack.c.l.b16 %v1538
    %v1674 = vunpack.c.l.b16 %v1539
    %v1675 = vunpack.c.l.b16 %v1540
    %v1676 = vunpack.c.l.b16 %v1541
    %v1677 = vunpack.c.l.b16 %v1542
    %v1678 = vunpack.c.l.b16 %v1543
    %v1679 = vunpack.c.l.b16 %v1544
    %v1680 = vunpack.c.l.b16 %v1545
    %v1681 = vunpack.c.l.b16 %v1546
    %v1682 = vunpack.c.l.b16 %v1547
    %v1683 = vunpack.c.l.b16 %v1548
    %v1684 = vunpack.c.l.b16 %v1549
    %v1685 = vunpack.c.l.b16 %v1550
    %v1686 = vunpack.c.l.b16 %v1551
    %v1687 = vunpack.c.l.b16 %v1552
    %v1688 = vunpack.c.l.b16 %v1553
    %v1689 = vunpack.c.l.b16 %v1554
    %v1690 = vunpack.c.l.b16 %v1555
    %v1691 = vunpack.c.l.b16 %v1556
    %v1692 = vunpack.c.l.b16 %v1557
    %v1693 = vunpack.c.l.b16 %v1558
    %v1694 = vunpack.c.l.b16 %v1559
    %v1695 = vunpack.c.l.b16 %v1560
    %v1696 = vunpack.c.l.b16 %v1561
    %v1697 = vunpack.c.l.b16 %v1562
    %v1698 = vunpack.c.l.b16 %v1563
    %v1699 = vunpack.c.l.b16 %v1564
    %v1700 = vunpack.c.l.b16 %v1565
    %v1701 = vunpack.c.l.b16 %v1566
    %v1702 = vunpack.c.l.b16 %v1567
    %v1703 = vunpack.c.l.b16 %v1568
    %v1704 = vunpack.c.l.b16 %v1569
    %v1705 = vunpack.c.l.b16 %v1570
    %v1706 = vunpack.c.l.b16 %v1571
    %v1707 = vunpack.c.l.b16 %v1572
    %v1708 = vpack.c.b16 %v1645, %v1644
    %v1709 = vpack.c.b16 %v1647, %v1646
    %v1710 = vpack.c.b16 %v1649, %v1648
    %v1711 = vpack.c.b16 %v1651, %v1650
    %v1712 = vpack.c.b16 %v1653, %v1652
    %v1713 = vpack.c.b16 %v1655, %v1654
    %v1714 = vpack.c.b16 %v1657, %v1656
    %v1715 = vpack.c.b16 %v1659, %v1658
    %v1716 = vpack.c.b16 %v1661, %v1660
    %v1717 = vpack.c.b16 %v1663, %v1662
    %v1718 = vpack.c.b16 %v1665, %v1664
    %v1719 = vpack.c.b16 %v1667, %v1666
    %v1720 = vpack.c.b16 %v1669, %v1668
    %v1721 = vpack.c.b16 %v1671, %v1670
    %v1722 = vpack.c.b16 %v1673, %v1672
    %v1723 = vpack.c.b16 %v1675, %v1674
    %v1724 = vpack.c.b16 %v1677, %v1676
    %v1725 = vpack.c.b16 %v1679, %v1678
    %v1726 = vpack.c.b16 %v1681, %v1680
    %v1727 = vpack.c.b16 %v1683, %v1682
    %v1728 = vpack.c.b16 %v1685, %v1684
    %v1729 = vpack.c.b16 %v1687, %v1686
    %v1730 = vpack.c.b16 %v1689, %v1688
    %v1731 = vpack.c.b16 %v1691, %v1690
    %v1732 = vpack.c.b16 %v1693, %v1692
    %v1733 = vpack.c.b16 %v1695, %v1694
    %v1734 = vpack.c.b16 %v1697, %v1696
    %v1735 = vpack.c.b16 %v1699, %v1698
    %v1736 = vpack.c.b16 %v1701, %v1700
    %v1737 = vpack.c.b16 %v1703, %v1702
    %v1738 = vpack.c.b16 %v1705, %v1704
    %v1739 = vpack.c.b16 %v1707, %v1706
    %1772 = vmatprep.subr.bf16.mxu0 0
    %1773 = vmatpush1.bf16.msra.mxu0 %v1715
    %1774 = vmatprep.subr.bf16.mxu0 0
    %1775 = vmatpush1.bf16.msra.mxu0 %v1714
    %1776 = vmatprep.subr.bf16.mxu0 0
    %1777 = vmatpush1.bf16.msra.mxu0 %v1713
    %1778 = vmatprep.subr.bf16.mxu0 0
    %1779 = vmatpush1.bf16.msra.mxu0 %v1712
    %1780 = vmatprep.subr.bf16.mxu0 0
    %1781 = vmatpush1.bf16.msra.mxu0 %v1711
    %1782 = vmatprep.subr.bf16.mxu0 0
    %1783 = vmatpush1.bf16.msra.mxu0 %v1710
    %1784 = vmatprep.subr.bf16.mxu0 0
    %1785 = vmatpush1.bf16.msra.mxu0 %v1709
    %1786 = vmatprep.subr.bf16.mxu0 0
    %1787 = vmatpush1.bf16.msra.mxu0 %v1708
    %1788 = vmatprep.subr.bf16.mxu0 0
    %1789 = vmatpush2.bf16.msra.mxu0 %v1723
    %1790 = vmatprep.subr.bf16.mxu0 0
    %1791 = vmatpush2.bf16.msra.mxu0 %v1722
    %1792 = vmatprep.subr.bf16.mxu0 0
    %1793 = vmatpush2.bf16.msra.mxu0 %v1721
    %1794 = vmatprep.subr.bf16.mxu0 0
    %1795 = vmatpush2.bf16.msra.mxu0 %v1720
    %1796 = vmatprep.subr.bf16.mxu0 0
    %1797 = vmatpush2.bf16.msra.mxu0 %v1719
    %1798 = vmatprep.subr.bf16.mxu0 0
    %1799 = vmatpush2.bf16.msra.mxu0 %v1718
    %1800 = vmatprep.subr.bf16.mxu0 0
    %1801 = vmatpush2.bf16.msra.mxu0 %v1717
    %1802 = vmatprep.subr.bf16.mxu0 0
    %1803 = vmatpush2.bf16.msra.mxu0 %v1716
    %1804 = vmatprep.mubr.bf16.mxu0 %v1236
    %1805 = vmatmul.mubr.bf16.gmra.mxu0 %v1100
    %v1806 = vpop.f32.mrf.mxu0
    %v1807 = vadd.f32 %v1578, %v1806
    %v1808 = vpop.f32.mrf.mxu0
    %v1809 = vpop.f32.mrf.mxu0
    %v1810 = vpop.f32.mrf.mxu0
    %1811 = vdwg.mxu0
    %1812 = vmatprep.subr.bf16.mxu0 0
    %1813 = vmatpush1.bf16.msra.mxu0 %v1731
    %1814 = vmatprep.subr.bf16.mxu0 0
    %1815 = vmatpush1.bf16.msra.mxu0 %v1730
    %1816 = vmatprep.subr.bf16.mxu0 0
    %1817 = vmatpush1.bf16.msra.mxu0 %v1729
    %1818 = vmatprep.subr.bf16.mxu0 0
    %1819 = vmatpush1.bf16.msra.mxu0 %v1728
    %1820 = vmatprep.subr.bf16.mxu0 0
    %1821 = vmatpush1.bf16.msra.mxu0 %v1727
    %1822 = vmatprep.subr.bf16.mxu0 0
    %1823 = vmatpush1.bf16.msra.mxu0 %v1726
    %1824 = vmatprep.subr.bf16.mxu0 0
    %1825 = vmatpush1.bf16.msra.mxu0 %v1725
    %1826 = vmatprep.subr.bf16.mxu0 0
    %1827 = vmatpush1.bf16.msra.mxu0 %v1724
    %1828 = vmatprep.subr.bf16.mxu0 0
    %1829 = vmatpush2.bf16.msra.mxu0 %v1739
    %1830 = vmatprep.subr.bf16.mxu0 0
    %1831 = vmatpush2.bf16.msra.mxu0 %v1738
    %1832 = vmatprep.subr.bf16.mxu0 0
    %1833 = vmatpush2.bf16.msra.mxu0 %v1737
    %1834 = vmatprep.subr.bf16.mxu0 0
    %1835 = vmatpush2.bf16.msra.mxu0 %v1736
    %1836 = vmatprep.subr.bf16.mxu0 0
    %1837 = vmatpush2.bf16.msra.mxu0 %v1735
    %1838 = vmatprep.subr.bf16.mxu0 0
    %1839 = vmatpush2.bf16.msra.mxu0 %v1734
    %1840 = vmatprep.subr.bf16.mxu0 0
    %1841 = vmatpush2.bf16.msra.mxu0 %v1733
    %1842 = vmatprep.subr.bf16.mxu0 0
    %1843 = vmatpush2.bf16.msra.mxu0 %v1732
    %1844 = vmatprep.mubr.bf16.mxu0 %v1508
    %1845 = vmatmul.mubr.bf16.gmra.mxu0 %v1372
    %v1846 = vpop.f32.mrf.mxu0
    %v1847 = vadd.f32 %v1807, %v1846
    %v1848 = vpop.f32.mrf.mxu0
    %v1849 = vpop.f32.mrf.mxu0
    %v1850 = vpop.f32.mrf.mxu0
    %1851 = vdwg.mxu0
    %v1852 = vmax.f32 %v1847, 0.0
    %vm1853 = vcmask 517120
    %1854 = vst.msk [vmem:[#allocation13] sm:$0x3] %vm1853, %v1852
    // Predicated region
    $region66: #{tpu_custom_call.1} parent=1 // pred_check
      _
    $region67: #{tpu_custom_call.1} parent=1 // pred_check_branch
      %1856 = sbr.rel (0) target = $region69
    $region68: #{tpu_custom_call.1} parent=1 // pred_region
      %s1858 = ssub.s32 32, 32
      %1859 = vsyncadd [#allocation4], %s1858
      %s1861 = sshll.u32 [#allocation13], 4
      %s1862 = int_to_ptr.vmem [resolvable:$true] %s1861
      %1864 = dma.vmem_to_hbm [thread:$0]  %s1862, 32, %s10, [#allocation4]
    $region69: #{tpu_custom_call.1} parent=1 // pred_fallthru
      _
    // Predicated region
    $region70: #{tpu_custom_call.1} parent=1 // pred_check
      _
    $region71: #{tpu_custom_call.1} parent=1 // pred_check_branch
      %1866 = sbr.rel (0) target = $region73
    $region72: #{tpu_custom_call.1} parent=1 // pred_region
      %1867 = dma.done [#allocation4], 32
    $region73: #{tpu_custom_call.1} parent=1 // pred_fallthru
      _
    %1868 = vsyncpa [#allocation3], 1
    %1869 = vsyncpa [#allocation6], 1
    %1870 = vsyncpa [#allocation9], 1
    %1871 = vsyncpa [#allocation12], 1
    %1872 = vsyncpa [#allocation4], 1

</llo_original>
